<compile_context>
chip_gen: v5e
topology: v5e:2x2
jax: 0.10.0
libtpu: 0.0.40
codegen_flags: <defaults>
</compile_context>

<pallas_src>
import functools

import jax
import jax.numpy as jnp
from jax import lax
from jax.experimental import pallas as pl
from jax.experimental.pallas import tpu as pltpu

_LANE = 128


def _round_up(n, m):
    return ((n + m - 1) // m) * m


def _vmem_limit_bytes():
    """Generation-aware scoped-VMEM limit (96 MiB v4/v5e/v6e, 48 MiB v7x)."""
    try:
        kind = jax.devices()[0].device_kind.lower().replace(" ", "")
    except Exception:
        kind = ""
    if "v7" in kind or "tpu7" in kind:
        return 48 * 1024 * 1024
    if "v6" in kind or "v5" in kind or "v4" in kind:
        return 96 * 1024 * 1024
    return 32 * 1024 * 1024  # unknown: stay conservative


# ---------------------------------------------------------------------------
# Kernel 1: fused dense + stacked 4-way MLP projection (+ ELU), row-tiled.
# Weights pre-transposed to [K, N] and lane-padded; bf16 operands, f32 accum.
# ---------------------------------------------------------------------------
def _fused_mlp_kernel(x_ref, wd_ref, bd_ref, w4_ref, b4_ref,
                      ah_ref, ad_ref, rh_ref, rd_ref, *, n_in_pad):
    xb = x_ref[...].astype(jnp.bfloat16)
    h = lax.dot_general(xb, wd_ref[...], (((1,), (0,)), ((), ())),
                        preferred_element_type=jnp.float32) + bd_ref[...]
    hb = h.astype(jnp.bfloat16)
    z = lax.dot_general(hb, w4_ref[...], (((1,), (0,)), ((), ())),
                        preferred_element_type=jnp.float32) + b4_ref[...]
    # ELU(alpha=1); clamp the exp argument so the unselected branch never infs
    # (padded / masked rows may hold garbage — writes are masked anyway).
    a = jnp.where(z > 0, z, jnp.exp(jnp.minimum(z, 0.0)) - 1.0).astype(jnp.bfloat16)
    # n_in_pad % 128 == 0 -> these static lane slices are free, aligned views.
    ah_ref[...] = a[:, 0 * n_in_pad:1 * n_in_pad]
    ad_ref[...] = a[:, 1 * n_in_pad:2 * n_in_pad]
    rh_ref[...] = a[:, 2 * n_in_pad:3 * n_in_pad]
    rd_ref[...] = a[:, 3 * n_in_pad:4 * n_in_pad]


def fused_mlp(x2d, dense_w_t, dense_b, mlp4_w_t, mlp4_b, *, row_tile=512):
    N, ORI = x2d.shape
    INP = dense_w_t.shape[1]
    tn = N if N <= row_tile else row_tile
    act = jax.ShapeDtypeStruct((N, INP), jnp.bfloat16)
    out_spec = pl.BlockSpec((tn, INP), lambda i: (i, 0))
    kernel = functools.partial(_fused_mlp_kernel, n_in_pad=INP)
    return pl.pallas_call(
        kernel,
        out_shape=(act, act, act, act),
        grid=(pl.cdiv(N, tn),),
        in_specs=[
            pl.BlockSpec((tn, ORI), lambda i: (i, 0)),
            pl.BlockSpec((ORI, INP), lambda i: (0, 0)),       # resident
            pl.BlockSpec((1, INP), lambda i: (0, 0)),         # resident
            pl.BlockSpec((INP, 4 * INP), lambda i: (0, 0)),   # resident
            pl.BlockSpec((1, 4 * INP), lambda i: (0, 0)),     # resident
        ],
        out_specs=(out_spec, out_spec, out_spec, out_spec),
        compiler_params=pltpu.CompilerParams(
            dimension_semantics=("parallel",),
            vmem_limit_bytes=_vmem_limit_bytes()),
    )(x2d, dense_w_t, dense_b, mlp4_w_t, mlp4_b)


# ---------------------------------------------------------------------------
# Kernel 2: fused arc + rel biaffine scorer.
# Grid: (batch, S row-tiles, O label-chunks).  Bias handling is done with
# rank-1 folds (no cat1 concat, no per-label broadcast of the row bias).
# ---------------------------------------------------------------------------
def _scorer_kernel(arc_ht_ref, arc_d_ref, rel_ht_ref, rel_d_ref,
                   awm_ref, awb_ref, rwm_ref, rwbr_ref, rwbc_ref, rwc_ref,
                   arc_ref, rel_ref, *, n_in_pad, oc_size):
    # Arc scores depend only on (batch, s-tile): compute once per O sweep.
    @pl.when(pl.program_id(2) == 0)
    def _arc():
        xw = lax.dot_general(arc_d_ref[0], awm_ref[...], (((1,), (0,)), ((), ())),
                             preferred_element_type=jnp.float32)        # [TS, INP]
        xw = (xw + awb_ref[...]).astype(jnp.bfloat16)   # bias-row folded into LHS
        s_arc = lax.dot_general(xw, arc_ht_ref[0], (((1,), (0,)), ((), ())),
                                preferred_element_type=jnp.float32)     # [TS, S]
        arc_ref[0] = s_arc.astype(arc_ref.dtype)

    rel_d = rel_d_ref[0]                  # [TS, INP] bf16
    rel_ht = rel_ht_ref[0]                # [INP, S]  bf16 (pre-transposed)
    # Wide first matmul over the whole label chunk; bias-row folded into LHS.
    xw_all = lax.dot_general(rel_d, rwm_ref[...], (((1,), (0,)), ((), ())),
                             preferred_element_type=jnp.float32)        # [TS, OC*INP]
    xw_all = (xw_all + rwbr_ref[...]).astype(jnp.bfloat16)
    # Column bias + corner: one small matmul per chunk (not per label).
    bcol = lax.dot_general(rel_d, rwbc_ref[0], (((1,), (0,)), ((), ())),
                           preferred_element_type=jnp.float32)          # [TS, OC]
    bcol = bcol + rwc_ref[0]
    # Fully-unrolled static loop over the chunk's labels; aligned lane slices,
    # lane-dense [TS, S] stores.
    for o in range(oc_size):
        xw_o = xw_all[:, o * n_in_pad:(o + 1) * n_in_pad]               # [TS, INP]
        so = lax.dot_general(xw_o, rel_ht, (((1,), (0,)), ((), ())),
                             preferred_element_type=jnp.float32)        # [TS, S]
        rel_ref[0, o] = (so + bcol[:, o:o + 1]).astype(rel_ref.dtype)


def biaffine_scorer(arc_ht, arc_d, rel_ht, rel_d,
                    arc_wmain, arc_wbrow, rel_wmain, rel_wbrow, rel_wbcol,
                    rel_wcorner, *, s_tile=128, o_chunk=8):
    B, INP, S = arc_ht.shape
    O = rel_wbcol.shape[1]
    ts = s_tile if (0 < s_tile <= S and S % s_tile == 0 and s_tile % 8 == 0) else S
    oc = o_chunk if (0 < o_chunk <= O and O % o_chunk == 0) else O
    ns, no = S // ts, O // oc

    # Chunk-friendly layouts for the tiny bias-col / corner weights so the
    # BlockSpec last dim equals the full array dim (no sub-128 lane blocks).
    rwbc_c = jnp.transpose(rel_wbcol.T.reshape(no, oc, INP), (0, 2, 1))   # [no,INP,oc]
    rwc_c = rel_wcorner.reshape(no, 1, oc)                                # [no,1,oc]

    kernel = functools.partial(_scorer_kernel, n_in_pad=INP, oc_size=oc)
    return pl.pallas_call(
        kernel,
        out_shape=(jax.ShapeDtypeStruct((B, S, S), jnp.float32),
                   jax.ShapeDtypeStruct((B, O, S, S), jnp.float32)),
        grid=(B, ns, no),
        in_specs=[
            pl.BlockSpec((1, INP, S), lambda b, s, c: (b, 0, 0)),    # arc_h^T
            pl.BlockSpec((1, ts, INP), lambda b, s, c: (b, s, 0)),   # arc_d tile
            pl.BlockSpec((1, INP, S), lambda b, s, c: (b, 0, 0)),    # rel_h^T
            pl.BlockSpec((1, ts, INP), lambda b, s, c: (b, s, 0)),   # rel_d tile
            pl.BlockSpec((INP, INP), lambda b, s, c: (0, 0)),        # arc W main (resident)
            pl.BlockSpec((1, INP), lambda b, s, c: (0, 0)),          # arc bias row (resident)
            pl.BlockSpec((INP, oc * INP), lambda b, s, c: (0, c)),   # rel W main (O-chunked)
            pl.BlockSpec((1, oc * INP), lambda b, s, c: (0, c)),     # rel bias row (O-chunked)
            pl.BlockSpec((1, INP, oc), lambda b, s, c: (c, 0, 0)),   # rel bias col (O-chunked)
            pl.BlockSpec((1, 1, oc), lambda b, s, c: (c, 0, 0)),     # rel corner  (O-chunked)
        ],
        out_specs=(
            pl.BlockSpec((1, ts, S), lambda b, s, c: (b, s, 0)),          # s_arc
            pl.BlockSpec((1, oc, ts, S), lambda b, s, c: (b, c, s, 0)),   # s_rel (lane-dense)
        ),
        compiler_params=pltpu.CompilerParams(
            dimension_semantics=("parallel", "parallel", "arbitrary"),
            vmem_limit_bytes=_vmem_limit_bytes()),
    )(arc_ht, arc_d, rel_ht, rel_d, arc_wmain, arc_wbrow, rel_wmain,
      rel_wbrow, rwbc_c, rwc_c)


# ---------------------------------------------------------------------------
# Parameter construction (deterministic; synthetic — no checkpoint load).
# NOTE: the PyTorch module zero-inits the BiLinear weights; we use small
# random values instead so the bilinear kernels are actually exercised.
# ---------------------------------------------------------------------------
def make_params(key, ori_size, in_size, out_size):
    ks = jax.random.split(key, 8)

    def xavier(k, dout, din):
        bound = (6.0 / (din + dout)) ** 0.5
        return jax.random.uniform(k, (dout, din), jnp.float32, -bound, bound)

    return {
        "dense_w": xavier(ks[0], in_size, ori_size),
        "dense_b": jnp.zeros((in_size,), jnp.float32),
        "head_w": xavier(ks[1], in_size, in_size),
        "head_b": jnp.zeros((in_size,), jnp.float32),
        "dep_w": xavier(ks[2], in_size, in_size),
        "dep_b": jnp.zeros((in_size,), jnp.float32),
        "lhead_w": xavier(ks[3], in_size, in_size),
        "lhead_b": jnp.zeros((in_size,), jnp.float32),
        "ldep_w": xavier(ks[4], in_size, in_size),
        "ldep_b": jnp.zeros((in_size,), jnp.float32),
        # arc_attn: n_out=1, bias_x=True, bias_y=False -> [1, in+1, in]
        "arc_w": 0.02 * jax.random.normal(ks[5], (1, in_size + 1, in_size),
                                          jnp.float32),
        # rel_attn: n_out=out_size, bias_x=True, bias_y=True -> [O, in+1, in+1]
        "rel_w": 0.02 * jax.random.normal(
            ks[6], (out_size, in_size + 1, in_size + 1), jnp.float32),
    }


def prepare_weights(p):
    """One-time preprocessing (would live at module init): transpose to [K,N],
    pad in_size up to a lane multiple (padded lanes are exact zeros all the way
    through, so results are unchanged), cast MXU operands to bf16, and split
    the BiLinear weights into main / bias-row / bias-col / corner pieces."""
    IN = p["head_w"].shape[0]
    O = p["rel_w"].shape[0]
    INP = _round_up(IN, _LANE)
    pj = INP - IN

    def lin_t(w):      # torch Linear weight [out, in] -> [in, out_pad] bf16
        return jnp.pad(w.T, ((0, 0), (0, pj))).astype(jnp.bfloat16)

    def mlp_t(w):      # [IN, IN] -> [INP, INP] bf16
        return jnp.pad(w.T, ((0, pj), (0, pj))).astype(jnp.bfloat16)

    def bias(b):       # [IN] -> [1, INP] f32
        return jnp.pad(b, (0, pj)).reshape(1, INP).astype(jnp.float32)

    mlp4_w = jnp.concatenate([mlp_t(p["head_w"]), mlp_t(p["dep_w"]),
                              mlp_t(p["lhead_w"]), mlp_t(p["ldep_w"])], axis=1)
    mlp4_b = jnp.concatenate([bias(p["head_b"]), bias(p["dep_b"]),
                              bias(p["lhead_b"]), bias(p["ldep_b"])], axis=1)

    arc_w = p["arc_w"]                                    # [1, IN+1, IN]
    rel_w = p["rel_w"]                                    # [O, IN+1, IN+1]

    # [IN_i, O, IN_j] -> [INP, O*INP]; column block o holds W[o].
    rel_main = jnp.transpose(rel_w[:, :IN, :IN], (1, 0, 2))
    rel_main = jnp.pad(rel_main, ((0, pj), (0, 0), (0, pj)))
    rel_main = rel_main.reshape(INP, O * INP).astype(jnp.bfloat16)

    return {
        "dense_w_t": lin_t(p["dense_w"]),                 # [ORI, INP] bf16
        "dense_b": bias(p["dense_b"]),                    # [1, INP] f32
        "mlp4_w_t": mlp4_w,                               # [INP, 4*INP] bf16
        "mlp4_b": mlp4_b,                                 # [1, 4*INP] f32
        "arc_wmain": jnp.pad(arc_w[0, :IN, :],
                             ((0, pj), (0, pj))).astype(jnp.bfloat16),      # [INP, INP]
        "arc_wbrow": jnp.pad(arc_w[0, IN, :],
                             (0, pj)).reshape(1, INP).astype(jnp.float32),  # [1, INP]
        "rel_wmain": rel_main,                                              # [INP, O*INP]
        "rel_wbrow": jnp.pad(rel_w[:, IN, :IN], ((0, 0), (0, pj))
                             ).reshape(1, O * INP).astype(jnp.float32),     # [1, O*INP]
        "rel_wbcol": jnp.pad(rel_w[:, :IN, IN].T,
                             ((0, pj), (0, 0))).astype(jnp.bfloat16),       # [INP, O]
        "rel_wcorner": rel_w[:, IN, IN].reshape(1, O).astype(jnp.float32),  # [1, O]
    }


# ---------------------------------------------------------------------------
# Forward wrapper.
# ---------------------------------------------------------------------------
def biaffine_forward(x, w, *, row_tile=512, s_tile=128, o_chunk=8,
                     transpose_rel=True):
    B, S, ORI = x.shape
    INP = w["dense_w_t"].shape[1]

    # TODO(synk): Dropout is identity in eval mode; training-mode masks not implemented.
    arc_h, arc_d, rel_h, rel_d = fused_mlp(
        x.reshape(B * S, ORI), w["dense_w_t"], w["dense_b"],
        w["mlp4_w_t"], w["mlp4_b"], row_tile=row_tile)

    # Cheap wrapper-side transpose of the small "head" activations to
    # [B, INP, S] so every scorer matmul is plain [M,K]x[K,N] (no trans_b push
    # repeated inside the unrolled label loop).
    arc_ht = jnp.transpose(arc_h.reshape(B, S, INP), (0, 2, 1))
    rel_ht = jnp.transpose(rel_h.reshape(B, S, INP), (0, 2, 1))
    arc_d = arc_d.reshape(B, S, INP)
    rel_d = rel_d.reshape(B, S, INP)

    s_arc, s_rel = biaffine_scorer(
        arc_ht, arc_d, rel_ht, rel_d,
        w["arc_wmain"], w["arc_wbrow"], w["rel_wmain"], w["rel_wbrow"],
        w["rel_wbcol"], w["rel_wcorner"], s_tile=s_tile, o_chunk=o_chunk)

    if transpose_rel:
        # Module contract is [B,S,S,O]; consumers that can take the lane-dense
        # [B,O,S,S] layout should pass transpose_rel=False and skip this extra
        # HBM round-trip over the largest tensor.
        s_rel = jnp.transpose(s_rel, (0, 2, 3, 1))
    return s_arc, s_rel


# ---------------------------------------------------------------------------
# Pure-JAX reference (mirrors the PyTorch module exactly, f32 throughout).
# ---------------------------------------------------------------------------
def biaffine_reference(x, p):
    elu = lambda z: jnp.where(z > 0, z, jnp.exp(jnp.minimum(z, 0.0)) - 1.0)
    lin = lambda h, wt, b: h @ wt.T + b
    cat1 = lambda t: jnp.concatenate([t, jnp.ones_like(t[..., :1])], axis=-1)

    h = lin(x, p["dense_w"], p["dense_b"])
    arc_h = elu(lin(h, p["head_w"], p["head_b"]))
    arc_d = elu(lin(h, p["dep_w"], p["dep_b"]))
    rel_h = elu(lin(h, p["lhead_w"], p["lhead_b"]))
    rel_d = elu(lin(h, p["ldep_w"], p["ldep_b"]))

    s_arc = jnp.einsum('bxi,oij,byj->boxy', cat1(arc_d), p["arc_w"], arc_h)[:, 0]
    s_rel = jnp.einsum('bxi,oij,byj->boxy', cat1(rel_d), p["rel_w"], cat1(rel_h))
    s_rel = jnp.transpose(s_rel, (0, 2, 3, 1))
    return s_arc, s_rel


def _rel_l2(a, b):
    a = a.astype(jnp.float32).ravel()
    b = b.astype(jnp.float32).ravel()
    return float(jnp.linalg.norm(a - b) / (jnp.linalg.norm(b) + 1e-12))


if __name__ == "__main__":
    B, S = 2, 16
    ORI, IN, OUT = 48, 32, 8   # small shapes consistent with the module

    key = jax.random.PRNGKey(0)
    kx, kp = jax.random.split(key)
    x = jax.random.normal(kx, (B, S, ORI), jnp.float32)
    params = make_params(kp, ORI, IN, OUT)
    weights = prepare_weights(params)

    # s_tile=8 / o_chunk=4 exercise the S-tiling and O-chunking grid axes at
    # these small demo shapes (production defaults: 128 / 8).
    fwd = jax.jit(functools.partial(biaffine_forward, s_tile=8, o_chunk=4))
    s_arc, s_rel = jax.block_until_ready(fwd(x, weights))
    r_arc, r_rel = biaffine_reference(x, params)

    assert s_arc.shape == (B, S, S), s_arc.shape
    assert s_rel.shape == (B, S, S, OUT), s_rel.shape
    # bf16 MXU operands -> loosened tolerance vs. the f32 reference.
    assert _rel_l2(s_arc, r_arc) < 5e-2, _rel_l2(s_arc, r_arc)
    assert _rel_l2(s_rel, r_rel) < 5e-2, _rel_l2(s_rel, r_rel)

    print("KERNEL_OK")
</pallas_src>

<mosaic_0001>
module attributes {stable_mosaic.version = 11 : i64} {
  func.func @_fused_mlp_kernel(%arg0: i32, %arg1: memref<32x48xf32, #tpu.memory_space<vmem>>, %arg2: memref<48x128xbf16, #tpu.memory_space<vmem>>, %arg3: memref<1x128xf32, #tpu.memory_space<vmem>>, %arg4: memref<128x512xbf16, #tpu.memory_space<vmem>>, %arg5: memref<1x512xf32, #tpu.memory_space<vmem>>, %arg6: memref<32x128xbf16, #tpu.memory_space<vmem>>, %arg7: memref<32x128xbf16, #tpu.memory_space<vmem>>, %arg8: memref<32x128xbf16, #tpu.memory_space<vmem>>, %arg9: memref<32x128xbf16, #tpu.memory_space<vmem>>) attributes {dimension_semantics = [#tpu.dimension_semantics<parallel>], iteration_bounds = array<i64: 1>, scalar_prefetch = 0 : i64, scratch_operands = 0 : i64, tpu.core_type = #tpu.core_type<tc>, window_params = [{transform_indices = @transform_0, window_bounds = array<i64: 32, 48>}, {pipeline_mode = #tpu.pipeline_mode<synchronous>, transform_indices = @transform_1, window_bounds = array<i64: 48, 128>}, {pipeline_mode = #tpu.pipeline_mode<synchronous>, transform_indices = @transform_2, window_bounds = array<i64: 1, 128>}, {pipeline_mode = #tpu.pipeline_mode<synchronous>, transform_indices = @transform_3, window_bounds = array<i64: 128, 512>}, {pipeline_mode = #tpu.pipeline_mode<synchronous>, transform_indices = @transform_4, window_bounds = array<i64: 1, 512>}, {transform_indices = @transform_5, window_bounds = array<i64: 32, 128>}, {transform_indices = @transform_6, window_bounds = array<i64: 32, 128>}, {transform_indices = @transform_7, window_bounds = array<i64: 32, 128>}, {transform_indices = @transform_8, window_bounds = array<i64: 32, 128>}]} {
    %c0 = arith.constant 0 : index
    %c0_0 = arith.constant 0 : index
    %0 = vector.load %arg1[%c0, %c0_0] : memref<32x48xf32, #tpu.memory_space<vmem>>, vector<32x48xf32>
    %1 = arith.truncf %0 : vector<32x48xf32> to vector<32x48xbf16>
    %c0_1 = arith.constant 0 : index
    %c0_2 = arith.constant 0 : index
    %2 = vector.load %arg2[%c0_1, %c0_2] : memref<48x128xbf16, #tpu.memory_space<vmem>>, vector<48x128xbf16>
    %cst = arith.constant dense<0.000000e+00> : vector<32x128xf32>
    %3 = tpu.matmul %1, %2, %cst {dimension_numbers = #tpu.dot_dimension_numbers<[1], [0], [0], [1], [0, 0, 1, 1], [], []>} : vector<32x48xbf16>, vector<48x128xbf16>, vector<32x128xf32> -> vector<32x128xf32>
    %c0_3 = arith.constant 0 : index
    %c0_4 = arith.constant 0 : index
    %4 = vector.load %arg3[%c0_3, %c0_4] : memref<1x128xf32, #tpu.memory_space<vmem>>, vector<1x128xf32>
    %5 = vector.broadcast %4 : vector<1x128xf32> to vector<32x128xf32>
    %6 = arith.addf %3, %5 : vector<32x128xf32>
    %7 = arith.truncf %6 : vector<32x128xf32> to vector<32x128xbf16>
    %c0_5 = arith.constant 0 : index
    %c0_6 = arith.constant 0 : index
    %8 = vector.load %arg4[%c0_5, %c0_6] : memref<128x512xbf16, #tpu.memory_space<vmem>>, vector<128x512xbf16>
    %cst_7 = arith.constant dense<0.000000e+00> : vector<32x512xf32>
    %9 = tpu.matmul %7, %8, %cst_7 {dimension_numbers = #tpu.dot_dimension_numbers<[1], [0], [0], [1], [0, 0, 1, 1], [], []>} : vector<32x128xbf16>, vector<128x512xbf16>, vector<32x512xf32> -> vector<32x512xf32>
    %c0_8 = arith.constant 0 : index
    %c0_9 = arith.constant 0 : index
    %10 = vector.load %arg5[%c0_8, %c0_9] : memref<1x512xf32, #tpu.memory_space<vmem>>, vector<1x512xf32>
    %11 = vector.broadcast %10 : vector<1x512xf32> to vector<32x512xf32>
    %12 = arith.addf %9, %11 : vector<32x512xf32>
    %cst_10 = arith.constant 0.000000e+00 : f32
    %13 = vector.broadcast %cst_10 : f32 to vector<32x512xf32>
    %14 = arith.cmpf ogt, %12, %13 : vector<32x512xf32>
    %cst_11 = arith.constant 0.000000e+00 : f32
    %15 = vector.broadcast %cst_11 : f32 to vector<32x512xf32>
    %16 = arith.minimumf %12, %15 : vector<32x512xf32>
    %17 = math.exp %16 : vector<32x512xf32>
    %cst_12 = arith.constant 1.000000e+00 : f32
    %18 = vector.broadcast %cst_12 : f32 to vector<32x512xf32>
    %19 = arith.subf %17, %18 : vector<32x512xf32>
    %20 = arith.select %14, %12, %19 : vector<32x512xi1>, vector<32x512xf32>
    %21 = arith.truncf %20 : vector<32x512xf32> to vector<32x512xbf16>
    %22 = vector.extract_strided_slice %21 {offsets = [0, 0], sizes = [32, 128], strides = [1, 1]} : vector<32x512xbf16> to vector<32x128xbf16>
    %c0_13 = arith.constant 0 : index
    %c0_14 = arith.constant 0 : index
    %23 = vector.load %arg6[%c0_13, %c0_14] : memref<32x128xbf16, #tpu.memory_space<vmem>>, vector<32x128xbf16>
    tpu.vector_store %arg6[%c0_13, %c0_14], %22 {strides = array<i32>} : memref<32x128xbf16, #tpu.memory_space<vmem>>, vector<32x128xbf16>,
    %24 = vector.extract_strided_slice %21 {offsets = [0, 128], sizes = [32, 128], strides = [1, 1]} : vector<32x512xbf16> to vector<32x128xbf16>
    %c0_15 = arith.constant 0 : index
    %c0_16 = arith.constant 0 : index
    %25 = vector.load %arg7[%c0_15, %c0_16] : memref<32x128xbf16, #tpu.memory_space<vmem>>, vector<32x128xbf16>
    tpu.vector_store %arg7[%c0_15, %c0_16], %24 {strides = array<i32>} : memref<32x128xbf16, #tpu.memory_space<vmem>>, vector<32x128xbf16>,
    %26 = vector.extract_strided_slice %21 {offsets = [0, 256], sizes = [32, 128], strides = [1, 1]} : vector<32x512xbf16> to vector<32x128xbf16>
    %c0_17 = arith.constant 0 : index
    %c0_18 = arith.constant 0 : index
    %27 = vector.load %arg8[%c0_17, %c0_18] : memref<32x128xbf16, #tpu.memory_space<vmem>>, vector<32x128xbf16>
    tpu.vector_store %arg8[%c0_17, %c0_18], %26 {strides = array<i32>} : memref<32x128xbf16, #tpu.memory_space<vmem>>, vector<32x128xbf16>,
    %28 = vector.extract_strided_slice %21 {offsets = [0, 384], sizes = [32, 128], strides = [1, 1]} : vector<32x512xbf16> to vector<32x128xbf16>
    %c0_19 = arith.constant 0 : index
    %c0_20 = arith.constant 0 : index
    %29 = vector.load %arg9[%c0_19, %c0_20] : memref<32x128xbf16, #tpu.memory_space<vmem>>, vector<32x128xbf16>
    tpu.vector_store %arg9[%c0_19, %c0_20], %28 {strides = array<i32>} : memref<32x128xbf16, #tpu.memory_space<vmem>>, vector<32x128xbf16>,
    return
  }
  func.func @transform_0(%arg0: i32) -> (i32, i32) {
    %c0_i32 = arith.constant 0 : i32
    %c0_i32_0 = arith.constant 0 : i32
    return %arg0, %c0_i32 : i32, i32
  }
  func.func @transform_1(%arg0: i32) -> (i32, i32) {
    %c0_i32 = arith.constant 0 : i32
    %c0_i32_0 = arith.constant 0 : i32
    %c0_i32_1 = arith.constant 0 : i32
    return %c0_i32, %c0_i32_0 : i32, i32
  }
  func.func @transform_2(%arg0: i32) -> (i32, i32) {
    %c0_i32 = arith.constant 0 : i32
    %c0_i32_0 = arith.constant 0 : i32
    %c0_i32_1 = arith.constant 0 : i32
    return %c0_i32, %c0_i32_0 : i32, i32
  }
  func.func @transform_3(%arg0: i32) -> (i32, i32) {
    %c0_i32 = arith.constant 0 : i32
    %c0_i32_0 = arith.constant 0 : i32
    %c0_i32_1 = arith.constant 0 : i32
    return %c0_i32, %c0_i32_0 : i32, i32
  }
  func.func @transform_4(%arg0: i32) -> (i32, i32) {
    %c0_i32 = arith.constant 0 : i32
    %c0_i32_0 = arith.constant 0 : i32
    %c0_i32_1 = arith.constant 0 : i32
    return %c0_i32, %c0_i32_0 : i32, i32
  }
  func.func @transform_5(%arg0: i32) -> (i32, i32) {
    %c0_i32 = arith.constant 0 : i32
    %c0_i32_0 = arith.constant 0 : i32
    return %arg0, %c0_i32 : i32, i32
  }
  func.func @transform_6(%arg0: i32) -> (i32, i32) {
    %c0_i32 = arith.constant 0 : i32
    %c0_i32_0 = arith.constant 0 : i32
    return %arg0, %c0_i32 : i32, i32
  }
  func.func @transform_7(%arg0: i32) -> (i32, i32) {
    %c0_i32 = arith.constant 0 : i32
    %c0_i32_0 = arith.constant 0 : i32
    return %arg0, %c0_i32 : i32, i32
  }
  func.func @transform_8(%arg0: i32) -> (i32, i32) {
    %c0_i32 = arith.constant 0 : i32
    %c0_i32_0 = arith.constant 0 : i32
    return %arg0, %c0_i32 : i32, i32
  }
}

module attributes {stable_mosaic.version = 11 : i64} {
  func.func @_scorer_kernel(%arg0: i32, %arg1: i32, %arg2: i32, %arg3: memref<1x128x16xbf16, #tpu.memory_space<vmem>>, %arg4: memref<1x8x128xbf16, #tpu.memory_space<vmem>>, %arg5: memref<1x128x16xbf16, #tpu.memory_space<vmem>>, %arg6: memref<1x8x128xbf16, #tpu.memory_space<vmem>>, %arg7: memref<128x128xbf16, #tpu.memory_space<vmem>>, %arg8: memref<1x128xf32, #tpu.memory_space<vmem>>, %arg9: memref<128x512xbf16, #tpu.memory_space<vmem>>, %arg10: memref<1x512xf32, #tpu.memory_space<vmem>>, %arg11: memref<1x128x4xbf16, #tpu.memory_space<vmem>>, %arg12: memref<1x1x4xf32, #tpu.memory_space<vmem>>, %arg13: memref<1x8x16xf32, #tpu.memory_space<vmem>>, %arg14: memref<1x4x8x16xf32, #tpu.memory_space<vmem>>) attributes {dimension_semantics = [#tpu.dimension_semantics<parallel>, #tpu.dimension_semantics<parallel>, #tpu.dimension_semantics<arbitrary>], iteration_bounds = array<i64: 2, 2, 2>, scalar_prefetch = 0 : i64, scratch_operands = 0 : i64, tpu.core_type = #tpu.core_type<tc>, window_params = [{transform_indices = @transform_0, window_bounds = array<i64: 1, 128, 16>}, {transform_indices = @transform_1, window_bounds = array<i64: 1, 8, 128>}, {transform_indices = @transform_2, window_bounds = array<i64: 1, 128, 16>}, {transform_indices = @transform_3, window_bounds = array<i64: 1, 8, 128>}, {pipeline_mode = #tpu.pipeline_mode<synchronous>, transform_indices = @transform_4, window_bounds = array<i64: 128, 128>}, {pipeline_mode = #tpu.pipeline_mode<synchronous>, transform_indices = @transform_5, window_bounds = array<i64: 1, 128>}, {transform_indices = @transform_6, window_bounds = array<i64: 128, 512>}, {transform_indices = @transform_7, window_bounds = array<i64: 1, 512>}, {transform_indices = @transform_8, window_bounds = array<i64: 1, 128, 4>}, {transform_indices = @transform_9, window_bounds = array<i64: 1, 1, 4>}, {transform_indices = @transform_10, window_bounds = array<i64: 1, 8, 16>}, {transform_indices = @transform_11, window_bounds = array<i64: 1, 4, 8, 16>}]} {
    %c0_i32 = arith.constant 0 : i32
    %0 = arith.cmpi eq, %arg2, %c0_i32 : i32
    %1 = arith.extui %0 : i1 to i32
    %c0_i32_0 = arith.constant 0 : i32
    %2 = arith.cmpi ne, %1, %c0_i32_0 : i32
    scf.if %2 {
      %c0_34 = arith.constant 0 : index
      %c0_35 = arith.constant 0 : index
      %c0_36 = arith.constant 0 : index
      %52 = vector.load %arg4[%c0_34, %c0_35, %c0_36] : memref<1x8x128xbf16, #tpu.memory_space<vmem>>, vector<1x8x128xbf16>
      %53 = vector.shape_cast %52 : vector<1x8x128xbf16> to vector<8x128xbf16>
      %c0_37 = arith.constant 0 : index
      %c0_38 = arith.constant 0 : index
      %54 = vector.load %arg7[%c0_37, %c0_38] : memref<128x128xbf16, #tpu.memory_space<vmem>>, vector<128x128xbf16>
      %cst_39 = arith.constant dense<0.000000e+00> : vector<8x128xf32>
      %55 = tpu.matmul %53, %54, %cst_39 {dimension_numbers = #tpu.dot_dimension_numbers<[1], [0], [0], [1], [0, 0, 1, 1], [], []>} : vector<8x128xbf16>, vector<128x128xbf16>, vector<8x128xf32> -> vector<8x128xf32>
      %c0_40 = arith.constant 0 : index
      %c0_41 = arith.constant 0 : index
      %56 = vector.load %arg8[%c0_40, %c0_41] : memref<1x128xf32, #tpu.memory_space<vmem>>, vector<1x128xf32>
      %57 = vector.broadcast %56 : vector<1x128xf32> to vector<8x128xf32>
      %58 = arith.addf %55, %57 : vector<8x128xf32>
      %59 = arith.truncf %58 : vector<8x128xf32> to vector<8x128xbf16>
      %c0_42 = arith.constant 0 : index
      %c0_43 = arith.constant 0 : index
      %c0_44 = arith.constant 0 : index
      %60 = vector.load %arg3[%c0_42, %c0_43, %c0_44] : memref<1x128x16xbf16, #tpu.memory_space<vmem>>, vector<1x128x16xbf16>
      %61 = vector.shape_cast %60 : vector<1x128x16xbf16> to vector<128x16xbf16>
      %cst_45 = arith.constant dense<0.000000e+00> : vector<8x16xf32>
      %62 = tpu.matmul %59, %61, %cst_45 {dimension_numbers = #tpu.dot_dimension_numbers<[1], [0], [0], [1], [0, 0, 1, 1], [], []>} : vector<8x128xbf16>, vector<128x16xbf16>, vector<8x16xf32> -> vector<8x16xf32>
      %c0_46 = arith.constant 0 : index
      %c0_47 = arith.constant 0 : index
      %c0_48 = arith.constant 0 : index
      %63 = vector.load %arg13[%c0_46, %c0_47, %c0_48] : memref<1x8x16xf32, #tpu.memory_space<vmem>>, vector<1x8x16xf32>
      %64 = vector.shape_cast %63 : vector<1x8x16xf32> to vector<8x16xf32>
      %65 = vector.shape_cast %62 : vector<8x16xf32> to vector<1x8x16xf32>
      tpu.vector_store %arg13[%c0_46, %c0_47, %c0_48], %65 {strides = array<i32>} : memref<1x8x16xf32, #tpu.memory_space<vmem>>, vector<1x8x16xf32>,
    } else {
    }
    %c0 = arith.constant 0 : index
    %c0_1 = arith.constant 0 : index
    %c0_2 = arith.constant 0 : index
    %3 = vector.load %arg6[%c0, %c0_1, %c0_2] : memref<1x8x128xbf16, #tpu.memory_space<vmem>>, vector<1x8x128xbf16>
    %4 = vector.shape_cast %3 : vector<1x8x128xbf16> to vector<8x128xbf16>
    %c0_3 = arith.constant 0 : index
    %c0_4 = arith.constant 0 : index
    %c0_5 = arith.constant 0 : index
    %5 = vector.load %arg5[%c0_3, %c0_4, %c0_5] : memref<1x128x16xbf16, #tpu.memory_space<vmem>>, vector<1x128x16xbf16>
    %6 = vector.shape_cast %5 : vector<1x128x16xbf16> to vector<128x16xbf16>
    %c0_6 = arith.constant 0 : index
    %c0_7 = arith.constant 0 : index
    %7 = vector.load %arg9[%c0_6, %c0_7] : memref<128x512xbf16, #tpu.memory_space<vmem>>, vector<128x512xbf16>
    %cst = arith.constant dense<0.000000e+00> : vector<8x512xf32>
    %8 = tpu.matmul %4, %7, %cst {dimension_numbers = #tpu.dot_dimension_numbers<[1], [0], [0], [1], [0, 0, 1, 1], [], []>} : vector<8x128xbf16>, vector<128x512xbf16>, vector<8x512xf32> -> vector<8x512xf32>
    %c0_8 = arith.constant 0 : index
    %c0_9 = arith.constant 0 : index
    %9 = vector.load %arg10[%c0_8, %c0_9] : memref<1x512xf32, #tpu.memory_space<vmem>>, vector<1x512xf32>
    %10 = vector.broadcast %9 : vector<1x512xf32> to vector<8x512xf32>
    %11 = arith.addf %8, %10 : vector<8x512xf32>
    %12 = arith.truncf %11 : vector<8x512xf32> to vector<8x512xbf16>
    %c0_10 = arith.constant 0 : index
    %c0_11 = arith.constant 0 : index
    %c0_12 = arith.constant 0 : index
    %13 = vector.load %arg11[%c0_10, %c0_11, %c0_12] : memref<1x128x4xbf16, #tpu.memory_space<vmem>>, vector<1x128x4xbf16>
    %14 = vector.shape_cast %13 : vector<1x128x4xbf16> to vector<128x4xbf16>
    %cst_13 = arith.constant dense<0.000000e+00> : vector<8x4xf32>
    %15 = tpu.matmul %4, %14, %cst_13 {dimension_numbers = #tpu.dot_dimension_numbers<[1], [0], [0], [1], [0, 0, 1, 1], [], []>} : vector<8x128xbf16>, vector<128x4xbf16>, vector<8x4xf32> -> vector<8x4xf32>
    %c0_14 = arith.constant 0 : index
    %c0_15 = arith.constant 0 : index
    %c0_16 = arith.constant 0 : index
    %16 = vector.load %arg12[%c0_14, %c0_15, %c0_16] : memref<1x1x4xf32, #tpu.memory_space<vmem>>, vector<1x1x4xf32>
    %17 = vector.shape_cast %16 : vector<1x1x4xf32> to vector<1x4xf32>
    %18 = vector.broadcast %17 : vector<1x4xf32> to vector<8x4xf32>
    %19 = arith.addf %15, %18 : vector<8x4xf32>
    %20 = vector.extract_strided_slice %12 {offsets = [0, 0], sizes = [8, 128], strides = [1, 1]} : vector<8x512xbf16> to vector<8x128xbf16>
    %cst_17 = arith.constant dense<0.000000e+00> : vector<8x16xf32>
    %21 = tpu.matmul %20, %6, %cst_17 {dimension_numbers = #tpu.dot_dimension_numbers<[1], [0], [0], [1], [0, 0, 1, 1], [], []>} : vector<8x128xbf16>, vector<128x16xbf16>, vector<8x16xf32> -> vector<8x16xf32>
    %22 = vector.extract_strided_slice %19 {offsets = [0, 0], sizes = [8, 1], strides = [1, 1]} : vector<8x4xf32> to vector<8x1xf32>
    %23 = vector.broadcast %22 : vector<8x1xf32> to vector<8x16xf32>
    %24 = arith.addf %21, %23 : vector<8x16xf32>
    %c0_18 = arith.constant 0 : index
    %c0_19 = arith.constant 0 : index
    %c0_20 = arith.constant 0 : index
    %c0_21 = arith.constant 0 : index
    %25 = vector.load %arg14[%c0_18, %c0_19, %c0_20, %c0_21] : memref<1x4x8x16xf32, #tpu.memory_space<vmem>>, vector<1x1x8x16xf32>
    %26 = vector.shape_cast %25 : vector<1x1x8x16xf32> to vector<8x16xf32>
    %27 = vector.shape_cast %24 : vector<8x16xf32> to vector<1x1x8x16xf32>
    tpu.vector_store %arg14[%c0_18, %c0_19, %c0_20, %c0_21], %27 {strides = array<i32>} : memref<1x4x8x16xf32, #tpu.memory_space<vmem>>, vector<1x1x8x16xf32>,
    %28 = vector.extract_strided_slice %12 {offsets = [0, 128], sizes = [8, 128], strides = [1, 1]} : vector<8x512xbf16> to vector<8x128xbf16>
    %cst_22 = arith.constant dense<0.000000e+00> : vector<8x16xf32>
    %29 = tpu.matmul %28, %6, %cst_22 {dimension_numbers = #tpu.dot_dimension_numbers<[1], [0], [0], [1], [0, 0, 1, 1], [], []>} : vector<8x128xbf16>, vector<128x16xbf16>, vector<8x16xf32> -> vector<8x16xf32>
    %30 = vector.extract_strided_slice %19 {offsets = [0, 1], sizes = [8, 1], strides = [1, 1]} : vector<8x4xf32> to vector<8x1xf32>
    %31 = vector.broadcast %30 : vector<8x1xf32> to vector<8x16xf32>
    %32 = arith.addf %29, %31 : vector<8x16xf32>
    %c0_23 = arith.constant 0 : index
    %c1 = arith.constant 1 : index
    %c0_24 = arith.constant 0 : index
    %c0_25 = arith.constant 0 : index
    %33 = vector.load %arg14[%c0_23, %c1, %c0_24, %c0_25] : memref<1x4x8x16xf32, #tpu.memory_space<vmem>>, vector<1x1x8x16xf32>
    %34 = vector.shape_cast %33 : vector<1x1x8x16xf32> to vector<8x16xf32>
    %35 = vector.shape_cast %32 : vector<8x16xf32> to vector<1x1x8x16xf32>
    tpu.vector_store %arg14[%c0_23, %c1, %c0_24, %c0_25], %35 {strides = array<i32>} : memref<1x4x8x16xf32, #tpu.memory_space<vmem>>, vector<1x1x8x16xf32>,
    %36 = vector.extract_strided_slice %12 {offsets = [0, 256], sizes = [8, 128], strides = [1, 1]} : vector<8x512xbf16> to vector<8x128xbf16>
    %cst_26 = arith.constant dense<0.000000e+00> : vector<8x16xf32>
    %37 = tpu.matmul %36, %6, %cst_26 {dimension_numbers = #tpu.dot_dimension_numbers<[1], [0], [0], [1], [0, 0, 1, 1], [], []>} : vector<8x128xbf16>, vector<128x16xbf16>, vector<8x16xf32> -> vector<8x16xf32>
    %38 = vector.extract_strided_slice %19 {offsets = [0, 2], sizes = [8, 1], strides = [1, 1]} : vector<8x4xf32> to vector<8x1xf32>
    %39 = vector.broadcast %38 : vector<8x1xf32> to vector<8x16xf32>
    %40 = arith.addf %37, %39 : vector<8x16xf32>
    %c0_27 = arith.constant 0 : index
    %c2 = arith.constant 2 : index
    %c0_28 = arith.constant 0 : index
    %c0_29 = arith.constant 0 : index
    %41 = vector.load %arg14[%c0_27, %c2, %c0_28, %c0_29] : memref<1x4x8x16xf32, #tpu.memory_space<vmem>>, vector<1x1x8x16xf32>
    %42 = vector.shape_cast %41 : vector<1x1x8x16xf32> to vector<8x16xf32>
    %43 = vector.shape_cast %40 : vector<8x16xf32> to vector<1x1x8x16xf32>
    tpu.vector_store %arg14[%c0_27, %c2, %c0_28, %c0_29], %43 {strides = array<i32>} : memref<1x4x8x16xf32, #tpu.memory_space<vmem>>, vector<1x1x8x16xf32>,
    %44 = vector.extract_strided_slice %12 {offsets = [0, 384], sizes = [8, 128], strides = [1, 1]} : vector<8x512xbf16> to vector<8x128xbf16>
    %cst_30 = arith.constant dense<0.000000e+00> : vector<8x16xf32>
    %45 = tpu.matmul %44, %6, %cst_30 {dimension_numbers = #tpu.dot_dimension_numbers<[1], [0], [0], [1], [0, 0, 1, 1], [], []>} : vector<8x128xbf16>, vector<128x16xbf16>, vector<8x16xf32> -> vector<8x16xf32>
    %46 = vector.extract_strided_slice %19 {offsets = [0, 3], sizes = [8, 1], strides = [1, 1]} : vector<8x4xf32> to vector<8x1xf32>
    %47 = vector.broadcast %46 : vector<8x1xf32> to vector<8x16xf32>
    %48 = arith.addf %45, %47 : vector<8x16xf32>
    %c0_31 = arith.constant 0 : index
    %c3 = arith.constant 3 : index
    %c0_32 = arith.constant 0 : index
    %c0_33 = arith.constant 0 : index
    %49 = vector.load %arg14[%c0_31, %c3, %c0_32, %c0_33] : memref<1x4x8x16xf32, #tpu.memory_space<vmem>>, vector<1x1x8x16xf32>
    %50 = vector.shape_cast %49 : vector<1x1x8x16xf32> to vector<8x16xf32>
    %51 = vector.shape_cast %48 : vector<8x16xf32> to vector<1x1x8x16xf32>
    tpu.vector_store %arg14[%c0_31, %c3, %c0_32, %c0_33], %51 {strides = array<i32>} : memref<1x4x8x16xf32, #tpu.memory_space<vmem>>, vector<1x1x8x16xf32>,
    return
  }
  func.func @transform_0(%arg0: i32, %arg1: i32, %arg2: i32) -> (i32, i32, i32) {
    %c0_i32 = arith.constant 0 : i32
    %c0_i32_0 = arith.constant 0 : i32
    %c0_i32_1 = arith.constant 0 : i32
    return %arg0, %c0_i32, %c0_i32_0 : i32, i32, i32
  }
  func.func @transform_1(%arg0: i32, %arg1: i32, %arg2: i32) -> (i32, i32, i32) {
    %c0_i32 = arith.constant 0 : i32
    %c0_i32_0 = arith.constant 0 : i32
    return %arg0, %arg1, %c0_i32 : i32, i32, i32
  }
  func.func @transform_2(%arg0: i32, %arg1: i32, %arg2: i32) -> (i32, i32, i32) {
    %c0_i32 = arith.constant 0 : i32
    %c0_i32_0 = arith.constant 0 : i32
    %c0_i32_1 = arith.constant 0 : i32
    return %arg0, %c0_i32, %c0_i32_0 : i32, i32, i32
  }
  func.func @transform_3(%arg0: i32, %arg1: i32, %arg2: i32) -> (i32, i32, i32) {
    %c0_i32 = arith.constant 0 : i32
    %c0_i32_0 = arith.constant 0 : i32
    return %arg0, %arg1, %c0_i32 : i32, i32, i32
  }
  func.func @transform_4(%arg0: i32, %arg1: i32, %arg2: i32) -> (i32, i32) {
    %c0_i32 = arith.constant 0 : i32
    %c0_i32_0 = arith.constant 0 : i32
    %c0_i32_1 = arith.constant 0 : i32
    return %c0_i32, %c0_i32_0 : i32, i32
  }
  func.func @transform_5(%arg0: i32, %arg1: i32, %arg2: i32) -> (i32, i32) {
    %c0_i32 = arith.constant 0 : i32
    %c0_i32_0 = arith.constant 0 : i32
    %c0_i32_1 = arith.constant 0 : i32
    return %c0_i32, %c0_i32_0 : i32, i32
  }
  func.func @transform_6(%arg0: i32, %arg1: i32, %arg2: i32) -> (i32, i32) {
    %c0_i32 = arith.constant 0 : i32
    %c0_i32_0 = arith.constant 0 : i32
    return %c0_i32, %arg2 : i32, i32
  }
  func.func @transform_7(%arg0: i32, %arg1: i32, %arg2: i32) -> (i32, i32) {
    %c0_i32 = arith.constant 0 : i32
    %c0_i32_0 = arith.constant 0 : i32
    return %c0_i32, %arg2 : i32, i32
  }
  func.func @transform_8(%arg0: i32, %arg1: i32, %arg2: i32) -> (i32, i32, i32) {
    %c0_i32 = arith.constant 0 : i32
    %c0_i32_0 = arith.constant 0 : i32
    %c0_i32_1 = arith.constant 0 : i32
    return %arg2, %c0_i32, %c0_i32_0 : i32, i32, i32
  }
  func.func @transform_9(%arg0: i32, %arg1: i32, %arg2: i32) -> (i32, i32, i32) {
    %c0_i32 = arith.constant 0 : i32
    %c0_i32_0 = arith.constant 0 : i32
    %c0_i32_1 = arith.constant 0 : i32
    return %arg2, %c0_i32, %c0_i32_0 : i32, i32, i32
  }
  func.func @transform_10(%arg0: i32, %arg1: i32, %arg2: i32) -> (i32, i32, i32) {
    %c0_i32 = arith.constant 0 : i32
    %c0_i32_0 = arith.constant 0 : i32
    return %arg0, %arg1, %c0_i32 : i32, i32, i32
  }
  func.func @transform_11(%arg0: i32, %arg1: i32, %arg2: i32) -> (i32, i32, i32, i32) {
    %c0_i32 = arith.constant 0 : i32
    %c0_i32_0 = arith.constant 0 : i32
    return %arg0, %arg2, %arg1, %c0_i32 : i32, i32, i32, i32
  }
}

</mosaic_0001>

<llo_original>
// kernel: biaffine_forward.2
$region0: #{biaffine_forward.2}
  #allocation0 [shape = 'u32[]', space=smem, size = 0x4, offset = 0x4, fixed_abs, tag = 'smem constant byte address 0x4 - core index']
  #allocation1 [shape = 'u32[72,128]{1,0:T(1,128)}', space=vmem, size = 0x9000, scoped, tag = 'internal scratch']
  %s0 = inlined_call_operand.hbm [shape: f32[32,48], index: 0, kind: input, shape index: {}]
  %s1 = inlined_call_operand.hbm [shape: bf16[48,128], index: 1, kind: input, shape index: {}]
  %s2 = inlined_call_operand.vmem [shape: f32[1,128], index: 2, kind: input, shape index: {}]
  %s3 = inlined_call_operand.hbm [shape: bf16[128,512], index: 3, kind: input, shape index: {}]
  %s4 = inlined_call_operand.vmem [shape: f32[1,512], index: 4, kind: input, shape index: {}]
  %s5 = inlined_call_operand.vmem [shape: bf16[32,128], index: 5, kind: output, shape index: {0}]
  %s6 = inlined_call_operand.vmem [shape: bf16[32,128], index: 6, kind: output, shape index: {1}]
  %s7 = inlined_call_operand.vmem [shape: bf16[32,128], index: 7, kind: output, shape index: {2}]
  %s8 = inlined_call_operand.vmem [shape: bf16[32,128], index: 8, kind: output, shape index: {3}]
  %9 = xla_tuple %s5, %s6, %s7, %s8
  %s10 = sld [smem:[#allocation0]]
  $region66: #{biaffine_forward.2} parent=0
    _
  %s12 = ssub.s32 1, %s10
  %s13 = scalar_select 0, %s12, %s10
  $region1: #{biaffine_forward.2} parent=0
    #allocation2 [shape = 'u8[16384]{0}', space=vmem, size = 0x4000, scoped, tag = 'input window, operand 0, single buffered']
    #allocation3 [shape = 's32[1]{0}', space=sflag, size = 0x4, scoped, tag = 'scoped memory for biaffine_forward.2']
    #allocation4 [shape = 'u8[12288]{0}', space=vmem, size = 0x3000, scoped, tag = 'input window, operand 1, single buffered']
    #allocation5 [shape = 's32[1]{0}', space=sflag, size = 0x4, scoped, tag = 'scoped memory for biaffine_forward.2']
    #allocation6 [shape = 'u8[131072]{0}', space=vmem, size = 0x20000, scoped, tag = 'input window, operand 3, single buffered']
    %14 = vsyncpa [#allocation3], 0
    %15 = vsyncpa [#allocation5], 0
    // Predicated region
    $region2: #{biaffine_forward.2} parent=1 // pred_check
      _
    $region3: #{biaffine_forward.2} parent=1 // pred_check_branch
      %17 = sbr.rel (0) target = $region5
    $region4: #{biaffine_forward.2} parent=1 // pred_region
      %19 = vsyncadd [#allocation3], 0
      %s20 = sshll.u32 %s0, 4
      %s21 = int_to_ptr.hbm [resolvable:$true] %s20
      %s22 = sshll.u32 [#allocation2], 4
      %s23 = int_to_ptr.vmem [resolvable:$true] %s22
      %28 = dma.hbm_to_vmem [thread:$0]  %s21, 512, %s23, [#allocation3], 128, 128, 8
    $region5: #{biaffine_forward.2} parent=1 // pred_fallthru
      _
    // Predicated region
    $region6: #{biaffine_forward.2} parent=1 // pred_check
      _
    $region7: #{biaffine_forward.2} parent=1 // pred_check_branch
      %30 = sbr.rel (0) target = $region9
    $region8: #{biaffine_forward.2} parent=1 // pred_region
      %32 = vsyncadd [#allocation5], 0
      %s33 = sshll.u32 %s1, 4
      %s34 = int_to_ptr.hbm [resolvable:$true] %s33
      %s35 = sshll.u32 [#allocation4], 4
      %s36 = int_to_ptr.vmem [resolvable:$true] %s35
      %41 = dma.hbm_to_vmem [thread:$0]  %s34, 384, %s36, [#allocation5], 64, 64, 4
    $region9: #{biaffine_forward.2} parent=1 // pred_fallthru
      _
    // Predicated region
    $region10: #{biaffine_forward.2} parent=1 // pred_check
      _
    $region11: #{biaffine_forward.2} parent=1 // pred_check_branch
      %43 = sbr.rel (0) target = $region13
    $region12: #{biaffine_forward.2} parent=1 // pred_region
      _
    $region13: #{biaffine_forward.2} parent=1 // pred_fallthru
      _
    // Predicated region
    $region14: #{biaffine_forward.2} parent=1 // pred_check
      _
    $region15: #{biaffine_forward.2} parent=1 // pred_check_branch
      %45 = sbr.rel (0) target = $region17
    $region16: #{biaffine_forward.2} parent=1 // pred_region
      %47 = vsyncadd [#allocation5], 0
      %s48 = sshll.u32 %s3, 4
      %s49 = int_to_ptr.hbm [resolvable:$true] %s48
      %s50 = sshll.u32 [#allocation6], 4
      %s51 = int_to_ptr.vmem [resolvable:$true] %s50
      %56 = dma.hbm_to_vmem [thread:$0]  %s49, 4096, %s51, [#allocation5], 256, 256, 16
    $region17: #{biaffine_forward.2} parent=1 // pred_fallthru
      _
    // Predicated region
    $region18: #{biaffine_forward.2} parent=1 // pred_check
      _
    $region19: #{biaffine_forward.2} parent=1 // pred_check_branch
      %58 = sbr.rel (0) target = $region21
    $region20: #{biaffine_forward.2} parent=1 // pred_region
      _
    $region21: #{biaffine_forward.2} parent=1 // pred_fallthru
      _
    // Predicated region
    $region22: #{biaffine_forward.2} parent=1 // pred_check
      _
    $region23: #{biaffine_forward.2} parent=1 // pred_check_branch
      %60 = sbr.rel (0) target = $region25
    $region24: #{biaffine_forward.2} parent=1 // pred_region
      %62 = dma.done [#allocation3], 512
    $region25: #{biaffine_forward.2} parent=1 // pred_fallthru
      _
    // Predicated region
    $region26: #{biaffine_forward.2} parent=1 // pred_check
      _
    $region27: #{biaffine_forward.2} parent=1 // pred_check_branch
      %64 = sbr.rel (0) target = $region29
    $region28: #{biaffine_forward.2} parent=1 // pred_region
      %66 = dma.done [#allocation5], 384
    $region29: #{biaffine_forward.2} parent=1 // pred_fallthru
      _
    // Predicated region
    $region30: #{biaffine_forward.2} parent=1 // pred_check
      _
    $region31: #{biaffine_forward.2} parent=1 // pred_check_branch
      %68 = sbr.rel (0) target = $region33
    $region32: #{biaffine_forward.2} parent=1 // pred_region
      %70 = dma.done [#allocation5], 4096
    $region33: #{biaffine_forward.2} parent=1 // pred_fallthru
      _
    %v72 = vld [vmem:[#allocation2] sm:$0xff]
    %v73 = vld [vmem:[#allocation2 + $0x8] sm:$0xff]
    %v74 = vld [vmem:[#allocation2 + $0x10] sm:$0xff]
    %v75 = vld [vmem:[#allocation2 + $0x18] sm:$0xff]
    %v76 = vpack.c.bf16 %v73, %v72
    %v77 = vpack.c.bf16 %v75, %v74
    %v78 = vld [vmem:[#allocation4] sm:$0xf]
    %v79 = vld [vmem:[#allocation4 + $0x4] sm:$0xf]
    %v80 = vld [vmem:[#allocation4 + $0x8] sm:$0xf]
    %v81 = vld [vmem:[#allocation4 + $0xc] sm:$0xf]
    %v82 = vld [vmem:[#allocation4 + $0x10] sm:$0xf]
    %v83 = vld [vmem:[#allocation4 + $0x14] sm:$0xf]
    %v84 = vld [vmem:[%s2] sm:$0x1]
    %v86 = vperm.slane %v84, 0
    %v94 = vunpack.c.l.b16 %v78
    %v95 = vunpack.c.l.b16 %v79
    %v96 = vunpack.c.l.b16 %v80
    %v97 = vunpack.c.l.b16 %v81
    %v98 = vunpack.c.l.b16 %v82
    %v99 = vunpack.c.l.b16 %v83
    %v100 = vpack.c.b16 %v95, %v94
    %v101 = vpack.c.b16 %v97, %v96
    %v102 = vpack.c.b16 %v99, %v98
    %vm106 = vcmask 392192
    %v108 = vsel %vm106, %v76, 0
    %v111 = vsel %vm106, %v77, 0
    %113 = vmatpush.bf16.msra.mxu0 0
    %114 = vmatpush.bf16.msra.mxu0 0
    %115 = vmatpush.bf16.msra.mxu0 0
    %116 = vmatpush.bf16.msra.mxu0 0
    %117 = vmatpush.bf16.msra.mxu0 0
    %118 = vmatpush.bf16.msra.mxu0 %v102
    %119 = vmatpush.bf16.msra.mxu0 %v101
    %120 = vmatpush.bf16.msra.mxu0 %v100
    %121 = vmatmul.bf16.gmra.mxu0 %v108
    %v122 = vpop.f32.mrf.mxu0
    %v123 = vadd.f32 %v86, %v122
    %v124 = vpop.f32.mrf.mxu0
    %v125 = vadd.f32 %v86, %v124
    %126 = vmatmul.bf16.gmra.mxu0 %v111
    %v127 = vpop.f32.mrf.mxu0
    %v128 = vadd.f32 %v86, %v127
    %v129 = vpop.f32.mrf.mxu0
    %v130 = vadd.f32 %v86, %v129
    %131 = vdwg.mxu0
    %v132 = vpack.c.bf16 %v125, %v123
    %v133 = vpack.c.bf16 %v130, %v128
    %v134 = vld [vmem:[#allocation6] sm:$0xff]
    %v135 = vld [vmem:[#allocation6 + $0x8] sm:$0xff]
    %v136 = vld [vmem:[#allocation6 + $0x10] sm:$0xff]
    %v137 = vld [vmem:[#allocation6 + $0x18] sm:$0xff]
    %v138 = vld [vmem:[#allocation6 + $0x20] sm:$0xff]
    %v139 = vld [vmem:[#allocation6 + $0x28] sm:$0xff]
    %v140 = vld [vmem:[#allocation6 + $0x30] sm:$0xff]
    %v141 = vld [vmem:[#allocation6 + $0x38] sm:$0xff]
    %v142 = vld [vmem:[#allocation6 + $0x40] sm:$0xff]
    %v143 = vld [vmem:[#allocation6 + $0x48] sm:$0xff]
    %v144 = vld [vmem:[#allocation6 + $0x50] sm:$0xff]
    %v145 = vld [vmem:[#allocation6 + $0x58] sm:$0xff]
    %v146 = vld [vmem:[#allocation6 + $0x60] sm:$0xff]
    %v147 = vld [vmem:[#allocation6 + $0x68] sm:$0xff]
    %v148 = vld [vmem:[#allocation6 + $0x70] sm:$0xff]
    %v149 = vld [vmem:[#allocation6 + $0x78] sm:$0xff]
    %v150 = vld [vmem:[#allocation6 + $0x80] sm:$0xff]
    %v151 = vld [vmem:[#allocation6 + $0x88] sm:$0xff]
    %v152 = vld [vmem:[#allocation6 + $0x90] sm:$0xff]
    %v153 = vld [vmem:[#allocation6 + $0x98] sm:$0xff]
    %v154 = vld [vmem:[#allocation6 + $0xa0] sm:$0xff]
    %v155 = vld [vmem:[#allocation6 + $0xa8] sm:$0xff]
    %v156 = vld [vmem:[#allocation6 + $0xb0] sm:$0xff]
    %v157 = vld [vmem:[#allocation6 + $0xb8] sm:$0xff]
    %v158 = vld [vmem:[#allocation6 + $0xc0] sm:$0xff]
    %v159 = vld [vmem:[#allocation6 + $0xc8] sm:$0xff]
    %v160 = vld [vmem:[#allocation6 + $0xd0] sm:$0xff]
    %v161 = vld [vmem:[#allocation6 + $0xd8] sm:$0xff]
    %v162 = vld [vmem:[#allocation6 + $0xe0] sm:$0xff]
    %v163 = vld [vmem:[#allocation6 + $0xe8] sm:$0xff]
    %v164 = vld [vmem:[#allocation6 + $0xf0] sm:$0xff]
    %v165 = vld [vmem:[#allocation6 + $0xf8] sm:$0xff]
    %v166 = vld [vmem:[%s4] sm:$0xf]
    %v168 = vperm.slane %v166, 0
    %v169 = vperm.slane %v166, 1
    %v170 = vperm.slane %v166, 2
    %v171 = vperm.slane %v166, 3
    %v208 = vunpack.c.l.b16 %v134
    %v209 = vunpack.c.h.b16 %v134
    %v210 = vunpack.c.l.b16 %v135
    %v211 = vunpack.c.h.b16 %v135
    %v212 = vunpack.c.l.b16 %v136
    %v213 = vunpack.c.h.b16 %v136
    %v214 = vunpack.c.l.b16 %v137
    %v215 = vunpack.c.h.b16 %v137
    %v216 = vunpack.c.l.b16 %v138
    %v217 = vunpack.c.h.b16 %v138
    %v218 = vunpack.c.l.b16 %v139
    %v219 = vunpack.c.h.b16 %v139
    %v220 = vunpack.c.l.b16 %v140
    %v221 = vunpack.c.h.b16 %v140
    %v222 = vunpack.c.l.b16 %v141
    %v223 = vunpack.c.h.b16 %v141
    %v224 = vunpack.c.l.b16 %v142
    %v225 = vunpack.c.h.b16 %v142
    %v226 = vunpack.c.l.b16 %v143
    %v227 = vunpack.c.h.b16 %v143
    %v228 = vunpack.c.l.b16 %v144
    %v229 = vunpack.c.h.b16 %v144
    %v230 = vunpack.c.l.b16 %v145
    %v231 = vunpack.c.h.b16 %v145
    %v232 = vunpack.c.l.b16 %v146
    %v233 = vunpack.c.h.b16 %v146
    %v234 = vunpack.c.l.b16 %v147
    %v235 = vunpack.c.h.b16 %v147
    %v236 = vunpack.c.l.b16 %v148
    %v237 = vunpack.c.h.b16 %v148
    %v238 = vunpack.c.l.b16 %v149
    %v239 = vunpack.c.h.b16 %v149
    %v240 = vunpack.c.l.b16 %v150
    %v241 = vunpack.c.h.b16 %v150
    %v242 = vunpack.c.l.b16 %v151
    %v243 = vunpack.c.h.b16 %v151
    %v244 = vunpack.c.l.b16 %v152
    %v245 = vunpack.c.h.b16 %v152
    %v246 = vunpack.c.l.b16 %v153
    %v247 = vunpack.c.h.b16 %v153
    %v248 = vunpack.c.l.b16 %v154
    %v249 = vunpack.c.h.b16 %v154
    %v250 = vunpack.c.l.b16 %v155
    %v251 = vunpack.c.h.b16 %v155
    %v252 = vunpack.c.l.b16 %v156
    %v253 = vunpack.c.h.b16 %v156
    %v254 = vunpack.c.l.b16 %v157
    %v255 = vunpack.c.h.b16 %v157
    %v256 = vunpack.c.l.b16 %v158
    %v257 = vunpack.c.h.b16 %v158
    %v258 = vunpack.c.l.b16 %v159
    %v259 = vunpack.c.h.b16 %v159
    %v260 = vunpack.c.l.b16 %v160
    %v261 = vunpack.c.h.b16 %v160
    %v262 = vunpack.c.l.b16 %v161
    %v263 = vunpack.c.h.b16 %v161
    %v264 = vunpack.c.l.b16 %v162
    %v265 = vunpack.c.h.b16 %v162
    %v266 = vunpack.c.l.b16 %v163
    %v267 = vunpack.c.h.b16 %v163
    %v268 = vunpack.c.l.b16 %v164
    %v269 = vunpack.c.h.b16 %v164
    %v270 = vunpack.c.l.b16 %v165
    %v271 = vunpack.c.h.b16 %v165
    %v272 = vpack.c.b16 %v212, %v208
    %v273 = vpack.c.b16 %v213, %v209
    %v274 = vpack.c.b16 %v214, %v210
    %v275 = vpack.c.b16 %v215, %v211
    %v276 = vpack.c.b16 %v220, %v216
    %v277 = vpack.c.b16 %v221, %v217
    %v278 = vpack.c.b16 %v222, %v218
    %v279 = vpack.c.b16 %v223, %v219
    %v280 = vpack.c.b16 %v228, %v224
    %v281 = vpack.c.b16 %v229, %v225
    %v282 = vpack.c.b16 %v230, %v226
    %v283 = vpack.c.b16 %v231, %v227
    %v284 = vpack.c.b16 %v236, %v232
    %v285 = vpack.c.b16 %v237, %v233
    %v286 = vpack.c.b16 %v238, %v234
    %v287 = vpack.c.b16 %v239, %v235
    %v288 = vpack.c.b16 %v244, %v240
    %v289 = vpack.c.b16 %v245, %v241
    %v290 = vpack.c.b16 %v246, %v242
    %v291 = vpack.c.b16 %v247, %v243
    %v292 = vpack.c.b16 %v252, %v248
    %v293 = vpack.c.b16 %v253, %v249
    %v294 = vpack.c.b16 %v254, %v250
    %v295 = vpack.c.b16 %v255, %v251
    %v296 = vpack.c.b16 %v260, %v256
    %v297 = vpack.c.b16 %v261, %v257
    %v298 = vpack.c.b16 %v262, %v258
    %v299 = vpack.c.b16 %v263, %v259
    %v300 = vpack.c.b16 %v268, %v264
    %v301 = vpack.c.b16 %v269, %v265
    %v302 = vpack.c.b16 %v270, %v266
    %v303 = vpack.c.b16 %v271, %v267
    %336 = vmatpush.bf16.msra.mxu0 %v300
    %337 = vmatpush.bf16.msra.mxu0 %v296
    %338 = vmatpush.bf16.msra.mxu0 %v292
    %339 = vmatpush.bf16.msra.mxu0 %v288
    %340 = vmatpush.bf16.msra.mxu0 %v284
    %341 = vmatpush.bf16.msra.mxu0 %v280
    %342 = vmatpush.bf16.msra.mxu0 %v276
    %343 = vmatpush.bf16.msra.mxu0 %v272
    %344 = vmatmul.bf16.gmra.mxu0 %v132
    %v345 = vpop.f32.mrf.mxu0
    %v346 = vadd.f32 %v168, %v345
    %v347 = vpop.f32.mrf.mxu0
    %v348 = vadd.f32 %v168, %v347
    %349 = vmatmul.bf16.gmra.mxu0 %v133
    %v350 = vpop.f32.mrf.mxu0
    %v351 = vadd.f32 %v168, %v350
    %v352 = vpop.f32.mrf.mxu0
    %v353 = vadd.f32 %v168, %v352
    %354 = vdwg.mxu0
    %355 = vmatpush.bf16.msra.mxu0 %v301
    %356 = vmatpush.bf16.msra.mxu0 %v297
    %357 = vmatpush.bf16.msra.mxu0 %v293
    %358 = vmatpush.bf16.msra.mxu0 %v289
    %359 = vmatpush.bf16.msra.mxu0 %v285
    %360 = vmatpush.bf16.msra.mxu0 %v281
    %361 = vmatpush.bf16.msra.mxu0 %v277
    %362 = vmatpush.bf16.msra.mxu0 %v273
    %363 = vmatmul.bf16.gmra.mxu0 %v132
    %v364 = vpop.f32.mrf.mxu0
    %v365 = vadd.f32 %v169, %v364
    %v366 = vpop.f32.mrf.mxu0
    %v367 = vadd.f32 %v169, %v366
    %368 = vmatmul.bf16.gmra.mxu0 %v133
    %v369 = vpop.f32.mrf.mxu0
    %v370 = vadd.f32 %v169, %v369
    %v371 = vpop.f32.mrf.mxu0
    %v372 = vadd.f32 %v169, %v371
    %373 = vdwg.mxu0
    %374 = vmatpush.bf16.msra.mxu0 %v302
    %375 = vmatpush.bf16.msra.mxu0 %v298
    %376 = vmatpush.bf16.msra.mxu0 %v294
    %377 = vmatpush.bf16.msra.mxu0 %v290
    %378 = vmatpush.bf16.msra.mxu0 %v286
    %379 = vmatpush.bf16.msra.mxu0 %v282
    %380 = vmatpush.bf16.msra.mxu0 %v278
    %381 = vmatpush.bf16.msra.mxu0 %v274
    %382 = vmatmul.bf16.gmra.mxu0 %v132
    %v383 = vpop.f32.mrf.mxu0
    %v384 = vadd.f32 %v170, %v383
    %v385 = vpop.f32.mrf.mxu0
    %v386 = vadd.f32 %v170, %v385
    %387 = vmatmul.bf16.gmra.mxu0 %v133
    %v388 = vpop.f32.mrf.mxu0
    %v389 = vadd.f32 %v170, %v388
    %v390 = vpop.f32.mrf.mxu0
    %v391 = vadd.f32 %v170, %v390
    %392 = vdwg.mxu0
    %393 = vmatpush.bf16.msra.mxu0 %v303
    %394 = vmatpush.bf16.msra.mxu0 %v299
    %395 = vmatpush.bf16.msra.mxu0 %v295
    %396 = vmatpush.bf16.msra.mxu0 %v291
    %397 = vmatpush.bf16.msra.mxu0 %v287
    %398 = vmatpush.bf16.msra.mxu0 %v283
    %399 = vmatpush.bf16.msra.mxu0 %v279
    %400 = vmatpush.bf16.msra.mxu0 %v275
    %401 = vmatmul.bf16.gmra.mxu0 %v132
    %v402 = vpop.f32.mrf.mxu0
    %v403 = vadd.f32 %v171, %v402
    %v404 = vpop.f32.mrf.mxu0
    %v405 = vadd.f32 %v171, %v404
    %406 = vmatmul.bf16.gmra.mxu0 %v133
    %v407 = vpop.f32.mrf.mxu0
    %v408 = vadd.f32 %v171, %v407
    %v409 = vpop.f32.mrf.mxu0
    %v410 = vadd.f32 %v171, %v409
    %411 = vdwg.mxu0
    %vm412 = vcmp.gt.f32.partialorder %v346, 0.0
    %vm413 = vcmp.gt.f32.partialorder %v365, 0.0
    %vm414 = vcmp.gt.f32.partialorder %v384, 0.0
    %vm415 = vcmp.gt.f32.partialorder %v403, 0.0
    %vm416 = vcmp.gt.f32.partialorder %v348, 0.0
    %vm417 = vcmp.gt.f32.partialorder %v367, 0.0
    %vm418 = vcmp.gt.f32.partialorder %v386, 0.0
    %vm419 = vcmp.gt.f32.partialorder %v405, 0.0
    %vm420 = vcmp.gt.f32.partialorder %v351, 0.0
    %vm421 = vcmp.gt.f32.partialorder %v370, 0.0
    %vm422 = vcmp.gt.f32.partialorder %v389, 0.0
    %vm423 = vcmp.gt.f32.partialorder %v408, 0.0
    %vm424 = vcmp.gt.f32.partialorder %v353, 0.0
    %vm425 = vcmp.gt.f32.partialorder %v372, 0.0
    %vm426 = vcmp.gt.f32.partialorder %v391, 0.0
    %vm427 = vcmp.gt.f32.partialorder %v410, 0.0
    %v428 = vmin.f32 %v346, 0.0
    %v429 = vmin.f32 %v365, 0.0
    %v430 = vmin.f32 %v384, 0.0
    %v431 = vmin.f32 %v403, 0.0
    %v432 = vmin.f32 %v348, 0.0
    %v433 = vmin.f32 %v367, 0.0
    %v434 = vmin.f32 %v386, 0.0
    %v435 = vmin.f32 %v405, 0.0
    %v436 = vmin.f32 %v351, 0.0
    %v437 = vmin.f32 %v370, 0.0
    %v438 = vmin.f32 %v389, 0.0
    %v439 = vmin.f32 %v408, 0.0
    %v440 = vmin.f32 %v353, 0.0
    %v441 = vmin.f32 %v372, 0.0
    %v442 = vmin.f32 %v391, 0.0
    %v443 = vmin.f32 %v410, 0.0
    %v444 = vmul.f32 %v428, 1.442695
    %v445 = vpow.pop %v444
    %v446 = vmul.f32 %v429, 1.442695
    %v447 = vpow.pop %v446
    %v448 = vmul.f32 %v430, 1.442695
    %v449 = vpow.pop %v448
    %v450 = vmul.f32 %v431, 1.442695
    %v451 = vpow.pop %v450
    %v452 = vmul.f32 %v432, 1.442695
    %v453 = vpow.pop %v452
    %v454 = vmul.f32 %v433, 1.442695
    %v455 = vpow.pop %v454
    %v456 = vmul.f32 %v434, 1.442695
    %v457 = vpow.pop %v456
    %v458 = vmul.f32 %v435, 1.442695
    %v459 = vpow.pop %v458
    %v460 = vmul.f32 %v436, 1.442695
    %v461 = vpow.pop %v460
    %v462 = vmul.f32 %v437, 1.442695
    %v463 = vpow.pop %v462
    %v464 = vmul.f32 %v438, 1.442695
    %v465 = vpow.pop %v464
    %v466 = vmul.f32 %v439, 1.442695
    %v467 = vpow.pop %v466
    %v468 = vmul.f32 %v440, 1.442695
    %v469 = vpow.pop %v468
    %v470 = vmul.f32 %v441, 1.442695
    %v471 = vpow.pop %v470
    %v472 = vmul.f32 %v442, 1.442695
    %v473 = vpow.pop %v472
    %v474 = vmul.f32 %v443, 1.442695
    %v475 = vpow.pop %v474
    %v476 = vsub.f32 %v445, 1.0
    %v477 = vsub.f32 %v447, 1.0
    %v478 = vsub.f32 %v449, 1.0
    %v479 = vsub.f32 %v451, 1.0
    %v480 = vsub.f32 %v453, 1.0
    %v481 = vsub.f32 %v455, 1.0
    %v482 = vsub.f32 %v457, 1.0
    %v483 = vsub.f32 %v459, 1.0
    %v484 = vsub.f32 %v461, 1.0
    %v485 = vsub.f32 %v463, 1.0
    %v486 = vsub.f32 %v465, 1.0
    %v487 = vsub.f32 %v467, 1.0
    %v488 = vsub.f32 %v469, 1.0
    %v489 = vsub.f32 %v471, 1.0
    %v490 = vsub.f32 %v473, 1.0
    %v491 = vsub.f32 %v475, 1.0
    %v492 = vsel %vm412, %v346, %v476
    %v493 = vsel %vm413, %v365, %v477
    %v494 = vsel %vm414, %v384, %v478
    %v495 = vsel %vm415, %v403, %v479
    %v496 = vsel %vm416, %v348, %v480
    %v497 = vsel %vm417, %v367, %v481
    %v498 = vsel %vm418, %v386, %v482
    %v499 = vsel %vm419, %v405, %v483
    %v500 = vsel %vm420, %v351, %v484
    %v501 = vsel %vm421, %v370, %v485
    %v502 = vsel %vm422, %v389, %v486
    %v503 = vsel %vm423, %v408, %v487
    %v504 = vsel %vm424, %v353, %v488
    %v505 = vsel %vm425, %v372, %v489
    %v506 = vsel %vm426, %v391, %v490
    %v507 = vsel %vm427, %v410, %v491
    %v508 = vpack.c.bf16 %v493, %v492
    %v509 = vpack.c.bf16 %v495, %v494
    %v510 = vpack.c.bf16 %v497, %v496
    %v511 = vpack.c.bf16 %v499, %v498
    %v512 = vpack.c.bf16 %v501, %v500
    %v513 = vpack.c.bf16 %v503, %v502
    %v514 = vpack.c.bf16 %v505, %v504
    %v515 = vpack.c.bf16 %v507, %v506
    %516 = vst [vmem:[%s5] sm:$0xf] %v508
    %517 = vst [vmem:[%s5 + $0x4] sm:$0xf] %v510
    %518 = vst [vmem:[%s5 + $0x8] sm:$0xf] %v512
    %519 = vst [vmem:[%s5 + $0xc] sm:$0xf] %v514
    %v524 = vrot.slane %v508, 4
    %v525 = vrot.slane %v510, 4
    %v526 = vrot.slane %v512, 4
    %v527 = vrot.slane %v514, 4
    %532 = vst [vmem:[%s6] sm:$0xf] %v524
    %533 = vst [vmem:[%s6 + $0x4] sm:$0xf] %v525
    %534 = vst [vmem:[%s6 + $0x8] sm:$0xf] %v526
    %535 = vst [vmem:[%s6 + $0xc] sm:$0xf] %v527
    %536 = vst [vmem:[%s7] sm:$0xf] %v509
    %537 = vst [vmem:[%s7 + $0x4] sm:$0xf] %v511
    %538 = vst [vmem:[%s7 + $0x8] sm:$0xf] %v513
    %539 = vst [vmem:[%s7 + $0xc] sm:$0xf] %v515
    %v544 = vrot.slane %v509, 4
    %v545 = vrot.slane %v511, 4
    %v546 = vrot.slane %v513, 4
    %v547 = vrot.slane %v515, 4
    %552 = vst [vmem:[%s8] sm:$0xf] %v544
    %553 = vst [vmem:[%s8 + $0x4] sm:$0xf] %v545
    %554 = vst [vmem:[%s8 + $0x8] sm:$0xf] %v546
    %555 = vst [vmem:[%s8 + $0xc] sm:$0xf] %v547
    // Predicated region
    $region34: #{biaffine_forward.2} parent=1 // pred_check
      _
    $region35: #{biaffine_forward.2} parent=1 // pred_check_branch
      %557 = sbr.rel (0) target = $region37
    $region36: #{biaffine_forward.2} parent=1 // pred_region
      _
    $region37: #{biaffine_forward.2} parent=1 // pred_fallthru
      _
    // Predicated region
    $region38: #{biaffine_forward.2} parent=1 // pred_check
      _
    $region39: #{biaffine_forward.2} parent=1 // pred_check_branch
      %559 = sbr.rel (0) target = $region41
    $region40: #{biaffine_forward.2} parent=1 // pred_region
      _
    $region41: #{biaffine_forward.2} parent=1 // pred_fallthru
      _
    // Predicated region
    $region42: #{biaffine_forward.2} parent=1 // pred_check
      _
    $region43: #{biaffine_forward.2} parent=1 // pred_check_branch
      %561 = sbr.rel (0) target = $region45
    $region44: #{biaffine_forward.2} parent=1 // pred_region
      _
    $region45: #{biaffine_forward.2} parent=1 // pred_fallthru
      _
    // Predicated region
    $region46: #{biaffine_forward.2} parent=1 // pred_check
      _
    $region47: #{biaffine_forward.2} parent=1 // pred_check_branch
      %563 = sbr.rel (0) target = $region49
    $region48: #{biaffine_forward.2} parent=1 // pred_region
      _
    $region49: #{biaffine_forward.2} parent=1 // pred_fallthru
      _
    // Predicated region
    $region50: #{biaffine_forward.2} parent=1 // pred_check
      _
    $region51: #{biaffine_forward.2} parent=1 // pred_check_branch
      %565 = sbr.rel (0) target = $region53
    $region52: #{biaffine_forward.2} parent=1 // pred_region
      _
    $region53: #{biaffine_forward.2} parent=1 // pred_fallthru
      _
    // Predicated region
    $region54: #{biaffine_forward.2} parent=1 // pred_check
      _
    $region55: #{biaffine_forward.2} parent=1 // pred_check_branch
      %567 = sbr.rel (0) target = $region57
    $region56: #{biaffine_forward.2} parent=1 // pred_region
      _
    $region57: #{biaffine_forward.2} parent=1 // pred_fallthru
      _
    // Predicated region
    $region58: #{biaffine_forward.2} parent=1 // pred_check
      _
    $region59: #{biaffine_forward.2} parent=1 // pred_check_branch
      %569 = sbr.rel (0) target = $region61
    $region60: #{biaffine_forward.2} parent=1 // pred_region
      _
    $region61: #{biaffine_forward.2} parent=1 // pred_fallthru
      _
    // Predicated region
    $region62: #{biaffine_forward.2} parent=1 // pred_check
      _
    $region63: #{biaffine_forward.2} parent=1 // pred_check_branch
      %571 = sbr.rel (0) target = $region65
    $region64: #{biaffine_forward.2} parent=1 // pred_region
      _
    $region65: #{biaffine_forward.2} parent=1 // pred_fallthru
      _
    %572 = vsyncpa [#allocation3], 1
    %573 = vsyncpa [#allocation5], 1

// kernel: biaffine_forward.3
$region0: #{biaffine_forward.3}
  #allocation0 [shape = 'u32[]', space=smem, size = 0x4, offset = 0x4, fixed_abs, tag = 'smem constant byte address 0x4 - core index']
  #allocation1 [shape = 'u32[72,128]{1,0:T(1,128)}', space=vmem, size = 0x9000, scoped, tag = 'internal scratch']
  %s0 = inlined_call_operand.vmem [shape: bf16[2,128,16], index: 0, kind: input, shape index: {}]
  %s1 = inlined_call_operand.vmem [shape: bf16[2,16,128], index: 1, kind: input, shape index: {}]
  %s2 = inlined_call_operand.vmem [shape: bf16[2,128,16], index: 2, kind: input, shape index: {}]
  %s3 = inlined_call_operand.vmem [shape: bf16[2,16,128], index: 3, kind: input, shape index: {}]
  %s4 = inlined_call_operand.vmem [shape: bf16[128,128], index: 4, kind: input, shape index: {}]
  %s5 = inlined_call_operand.vmem [shape: f32[1,128], index: 5, kind: input, shape index: {}]
  %s6 = inlined_call_operand.hbm [shape: bf16[128,1024], index: 6, kind: input, shape index: {}]
  %s7 = inlined_call_operand.vmem [shape: f32[1,1024], index: 7, kind: input, shape index: {}]
  %s8 = inlined_call_operand.vmem [shape: bf16[2,128,4], index: 8, kind: input, shape index: {}]
  %s9 = inlined_call_operand.vmem [shape: f32[2,1,4], index: 9, kind: input, shape index: {}]
  %s10 = inlined_call_operand.hbm [shape: f32[2,16,16], index: 10, kind: output, shape index: {0}]
  %s11 = inlined_call_operand.vmem [shape: f32[2,8,16,16], index: 11, kind: output, shape index: {1}]
  %12 = xla_tuple %s10, %s11
  %s13 = sld [smem:[#allocation0]]
  $region123: #{biaffine_forward.3} parent=0
    _
  %s15 = ssub.s32 1, %s13
  %s16 = scalar_select 0, %s15, %s13
  $region1: #{biaffine_forward.3} parent=0
    #allocation2 [shape = 'u8[262144]{0}', space=vmem, size = 0x40000, scoped, tag = 'input window, operand 6']
    #allocation3 [shape = 's32[2]{0}', space=sflag, size = 0x8, scoped, tag = 'scoped memory for biaffine_forward.3']
    #allocation4 [shape = 's32[2]{0}', space=sflag, size = 0x8, scoped, tag = 'scoped memory for biaffine_forward.3']
    #allocation5 [shape = 'u8[8192]{0}', space=vmem, size = 0x2000, scoped, tag = 'output window, operand 0']
    #allocation6 [shape = 'u8[32768]{0}', space=vmem, size = 0x8000, scoped, tag = 'output window, operand 1']
    %17 = vsyncpa [#allocation3], 0
    %s18 = scalar_lea.sflag [#allocation3], 1
    %19 = vsyncpa %s18, 0
    %20 = vsyncpa [#allocation4], 0
    %s21 = scalar_lea.sflag [#allocation4], 1
    %22 = vsyncpa %s21, 0
    loop: start=0, step=1, limit=10
    $region2: #{biaffine_forward.3} parent=1 // loop_pre_header
      _
    $region3: #{biaffine_forward.3} parent=1 // loop_header
      %s24 = sphi 0, %s28
      %p25 = scmp.ge.s32.totalorder %s24, 10
      %s31 = sphi 0, %s50
      %s32 = sphi 0, %s46
      %s33 = sphi 0, %s42
      %s34 = sphi 0, %s31
      %s35 = sphi 0, %s32
      %s36 = sphi 0, %s33
      %s37 = sphi 0, %s34
      %s38 = sphi 0, %s35
      %s39 = sphi 0, %s36
      %s53 = sphi 0, %s55
      %s56 = sphi 0, %s53
      %s57 = sphi 0, %s56
      %s73 = sphi 0, %s57
      %s81 = sphi 0, %s83
      %s84 = sphi 0, %s81
      %s85 = sphi 0, %s84
      %s101 = sphi 0, %s85
      %s107 = sphi 0, %s109
      %s110 = sphi 0, %s107
      %s111 = sphi 0, %s110
      %s127 = sphi 0, %s111
      %s135 = sphi 0, %s137
      %s138 = sphi 0, %s135
      %s139 = sphi 0, %s138
      %s155 = sphi 0, %s139
      %s159 = sphi 0, %s159
      %s161 = sphi 0, %s159
      %s162 = sphi 0, %s161
      %s176 = sphi 0, %s162
      %s180 = sphi 0, %s180
      %s182 = sphi 0, %s180
      %s183 = sphi 0, %s182
      %s197 = sphi 0, %s183
      %s203 = sphi 0, %s205
      %s206 = sphi 0, %s203
      %s207 = sphi 0, %s206
      %s223 = sphi 0, %s207
      %s229 = sphi 0, %s231
      %s232 = sphi 0, %s229
      %s233 = sphi 0, %s232
      %s249 = sphi 0, %s233
      %s255 = sphi 0, %s257
      %s258 = sphi 0, %s255
      %s259 = sphi 0, %s258
      %s275 = sphi 0, %s259
      %s281 = sphi 0, %s283
      %s284 = sphi 0, %s281
      %s285 = sphi 0, %s284
      %s301 = sphi 0, %s285
      %s309 = sphi 0, %s311
      %s312 = sphi 0, %s309
      %s313 = sphi 0, %s312
      %s329 = sphi 0, %s313
      %s339 = sphi 0, %s341
      %s342 = sphi 0, %s339
      %s343 = sphi 0, %s342
      %s359 = sphi 0, %s343
    $region4: #{biaffine_forward.3} parent=1 // loop_header_branch
      %27 = sbr.rel (%p25) target = $region8
    $region5: #{biaffine_forward.3} parent=1 // loop_body
      %s29 = ssub.s32 %s24, 1
      %s30 = ssub.s32 %s24, 2
      %s40 = sadd.s32 1, %s33
      %p41 = scmp.ge.s32.totalorder %s40, 2
      %s42 = scalar_select %p41, 0, %s40
      %s43 = sadd.s32 1, %s32
      %s44 = scalar_select %p41, %s43, %s32
      %p45 = scmp.ge.s32.totalorder %s44, 2
      %s46 = scalar_select %p45, 0, %s44
      %s47 = sadd.s32 1, %s31
      %s48 = scalar_select %p45, %s47, %s31
      %p49 = scmp.ge.s32.totalorder %s48, 2
      %s50 = scalar_select %p49, 0, %s48
      %s51 = ssub.s32 %s31, %s50
      %p52 = scmp.eq.s32.totalorder %s51, 0
      %s54 = sadd.s32 %s53, 1
      %s55 = scalar_select %p52, %s53, %s54
      %p58 = pneg %p52
      %p59 = scmp.eq.s32.totalorder %s24, 7
      %p60 = por %p58, %p59
      %p61 = scmp.ne.s32.totalorder %s53, %s56
      %p62 = scmp.eq.s32.totalorder %s24, 0
      %p63 = por %p61, %p62
      %p64 = scmp.ne.s32.totalorder %s53, %s56
      %p65 = scmp.eq.s32.totalorder %s29, 7
      %p66 = por %p64, %p65
      %p67 = scmp.ne.s32.totalorder %s56, %s57
      %p68 = scmp.eq.s32.totalorder %s29, 0
      %p69 = por %p67, %p68
      %p70 = scmp.ne.s32.totalorder %s56, %s57
      %p71 = scmp.eq.s32.totalorder %s30, 7
      %p72 = por %p70, %p71
      %p74 = scmp.ne.s32.totalorder %s57, %s73
      %p75 = scmp.eq.s32.totalorder %s30, 0
      %p76 = por %p74, %p75
      %s77 = ssub.s32 %s31, %s50
      %s78 = ssub.s32 %s32, %s46
      %s79 = sor.u32 %s77, %s78
      %p80 = scmp.eq.s32.totalorder %s79, 0
      %s82 = sadd.s32 %s81, 1
      %s83 = scalar_select %p80, %s81, %s82
      %p86 = pneg %p80
      %p87 = scmp.eq.s32.totalorder %s24, 7
      %p88 = por %p86, %p87
      %p89 = scmp.ne.s32.totalorder %s81, %s84
      %p90 = scmp.eq.s32.totalorder %s24, 0
      %p91 = por %p89, %p90
      %p92 = scmp.ne.s32.totalorder %s81, %s84
      %p93 = scmp.eq.s32.totalorder %s29, 7
      %p94 = por %p92, %p93
      %p95 = scmp.ne.s32.totalorder %s84, %s85
      %p96 = scmp.eq.s32.totalorder %s29, 0
      %p97 = por %p95, %p96
      %p98 = scmp.ne.s32.totalorder %s84, %s85
      %p99 = scmp.eq.s32.totalorder %s30, 7
      %p100 = por %p98, %p99
      %p102 = scmp.ne.s32.totalorder %s85, %s101
      %p103 = scmp.eq.s32.totalorder %s30, 0
      %p104 = por %p102, %p103
      %s105 = ssub.s32 %s31, %s50
      %p106 = scmp.eq.s32.totalorder %s105, 0
      %s108 = sadd.s32 %s107, 1
      %s109 = scalar_select %p106, %s107, %s108
      %p112 = pneg %p106
      %p113 = scmp.eq.s32.totalorder %s24, 7
      %p114 = por %p112, %p113
      %p115 = scmp.ne.s32.totalorder %s107, %s110
      %p116 = scmp.eq.s32.totalorder %s24, 0
      %p117 = por %p115, %p116
      %p118 = scmp.ne.s32.totalorder %s107, %s110
      %p119 = scmp.eq.s32.totalorder %s29, 7
      %p120 = por %p118, %p119
      %p121 = scmp.ne.s32.totalorder %s110, %s111
      %p122 = scmp.eq.s32.totalorder %s29, 0
      %p123 = por %p121, %p122
      %p124 = scmp.ne.s32.totalorder %s110, %s111
      %p125 = scmp.eq.s32.totalorder %s30, 7
      %p126 = por %p124, %p125
      %p128 = scmp.ne.s32.totalorder %s111, %s127
      %p129 = scmp.eq.s32.totalorder %s30, 0
      %p130 = por %p128, %p129
      %s131 = ssub.s32 %s31, %s50
      %s132 = ssub.s32 %s32, %s46
      %s133 = sor.u32 %s131, %s132
      %p134 = scmp.eq.s32.totalorder %s133, 0
      %s136 = sadd.s32 %s135, 1
      %s137 = scalar_select %p134, %s135, %s136
      %p140 = pneg %p134
      %p141 = scmp.eq.s32.totalorder %s24, 7
      %p142 = por %p140, %p141
      %p143 = scmp.ne.s32.totalorder %s135, %s138
      %p144 = scmp.eq.s32.totalorder %s24, 0
      %p145 = por %p143, %p144
      %p146 = scmp.ne.s32.totalorder %s135, %s138
      %p147 = scmp.eq.s32.totalorder %s29, 7
      %p148 = por %p146, %p147
      %p149 = scmp.ne.s32.totalorder %s138, %s139
      %p150 = scmp.eq.s32.totalorder %s29, 0
      %p151 = por %p149, %p150
      %p152 = scmp.ne.s32.totalorder %s138, %s139
      %p153 = scmp.eq.s32.totalorder %s30, 7
      %p154 = por %p152, %p153
      %p156 = scmp.ne.s32.totalorder %s139, %s155
      %p157 = scmp.eq.s32.totalorder %s30, 0
      %p158 = por %p156, %p157
      %s160 = sadd.s32 %s159, 1
      %p163 = scmp.eq.s32.totalorder %s24, 7
      %p164 = scmp.ne.s32.totalorder %s159, %s161
      %p165 = scmp.eq.s32.totalorder %s24, 0
      %p166 = por %p164, %p165
      %p167 = scmp.ne.s32.totalorder %s159, %s161
      %p168 = scmp.eq.s32.totalorder %s29, 7
      %p169 = por %p167, %p168
      %p170 = scmp.ne.s32.totalorder %s161, %s162
      %p171 = scmp.eq.s32.totalorder %s29, 0
      %p172 = por %p170, %p171
      %p173 = scmp.ne.s32.totalorder %s161, %s162
      %p174 = scmp.eq.s32.totalorder %s30, 7
      %p175 = por %p173, %p174
      %p177 = scmp.ne.s32.totalorder %s162, %s176
      %p178 = scmp.eq.s32.totalorder %s30, 0
      %p179 = por %p177, %p178
      %s181 = sadd.s32 %s180, 1
      %p184 = scmp.eq.s32.totalorder %s24, 7
      %p185 = scmp.ne.s32.totalorder %s180, %s182
      %p186 = scmp.eq.s32.totalorder %s24, 0
      %p187 = por %p185, %p186
      %p188 = scmp.ne.s32.totalorder %s180, %s182
      %p189 = scmp.eq.s32.totalorder %s29, 7
      %p190 = por %p188, %p189
      %p191 = scmp.ne.s32.totalorder %s182, %s183
      %p192 = scmp.eq.s32.totalorder %s29, 0
      %p193 = por %p191, %p192
      %p194 = scmp.ne.s32.totalorder %s182, %s183
      %p195 = scmp.eq.s32.totalorder %s30, 7
      %p196 = por %p194, %p195
      %p198 = scmp.ne.s32.totalorder %s183, %s197
      %p199 = scmp.eq.s32.totalorder %s30, 0
      %p200 = por %p198, %p199
      %s201 = ssub.s32 %s33, %s42
      %p202 = scmp.eq.s32.totalorder %s201, 0
      %s204 = sadd.s32 %s203, 1
      %s205 = scalar_select %p202, %s203, %s204
      %p208 = pneg %p202
      %p209 = scmp.eq.s32.totalorder %s24, 7
      %p210 = por %p208, %p209
      %p211 = scmp.ne.s32.totalorder %s203, %s206
      %p212 = scmp.eq.s32.totalorder %s24, 0
      %p213 = por %p211, %p212
      %p214 = scmp.ne.s32.totalorder %s203, %s206
      %p215 = scmp.eq.s32.totalorder %s29, 7
      %p216 = por %p214, %p215
      %p217 = scmp.ne.s32.totalorder %s206, %s207
      %p218 = scmp.eq.s32.totalorder %s29, 0
      %p219 = por %p217, %p218
      %p220 = scmp.ne.s32.totalorder %s206, %s207
      %p221 = scmp.eq.s32.totalorder %s30, 7
      %p222 = por %p220, %p221
      %p224 = scmp.ne.s32.totalorder %s207, %s223
      %p225 = scmp.eq.s32.totalorder %s30, 0
      %p226 = por %p224, %p225
      %s227 = ssub.s32 %s33, %s42
      %p228 = scmp.eq.s32.totalorder %s227, 0
      %s230 = sadd.s32 %s229, 1
      %s231 = scalar_select %p228, %s229, %s230
      %p234 = pneg %p228
      %p235 = scmp.eq.s32.totalorder %s24, 7
      %p236 = por %p234, %p235
      %p237 = scmp.ne.s32.totalorder %s229, %s232
      %p238 = scmp.eq.s32.totalorder %s24, 0
      %p239 = por %p237, %p238
      %p240 = scmp.ne.s32.totalorder %s229, %s232
      %p241 = scmp.eq.s32.totalorder %s29, 7
      %p242 = por %p240, %p241
      %p243 = scmp.ne.s32.totalorder %s232, %s233
      %p244 = scmp.eq.s32.totalorder %s29, 0
      %p245 = por %p243, %p244
      %p246 = scmp.ne.s32.totalorder %s232, %s233
      %p247 = scmp.eq.s32.totalorder %s30, 7
      %p248 = por %p246, %p247
      %p250 = scmp.ne.s32.totalorder %s233, %s249
      %p251 = scmp.eq.s32.totalorder %s30, 0
      %p252 = por %p250, %p251
      %s253 = ssub.s32 %s33, %s42
      %p254 = scmp.eq.s32.totalorder %s253, 0
      %s256 = sadd.s32 %s255, 1
      %s257 = scalar_select %p254, %s255, %s256
      %p260 = pneg %p254
      %p261 = scmp.eq.s32.totalorder %s24, 7
      %p262 = por %p260, %p261
      %p263 = scmp.ne.s32.totalorder %s255, %s258
      %p264 = scmp.eq.s32.totalorder %s24, 0
      %p265 = por %p263, %p264
      %p266 = scmp.ne.s32.totalorder %s255, %s258
      %p267 = scmp.eq.s32.totalorder %s29, 7
      %p268 = por %p266, %p267
      %p269 = scmp.ne.s32.totalorder %s258, %s259
      %p270 = scmp.eq.s32.totalorder %s29, 0
      %p271 = por %p269, %p270
      %p272 = scmp.ne.s32.totalorder %s258, %s259
      %p273 = scmp.eq.s32.totalorder %s30, 7
      %p274 = por %p272, %p273
      %p276 = scmp.ne.s32.totalorder %s259, %s275
      %p277 = scmp.eq.s32.totalorder %s30, 0
      %p278 = por %p276, %p277
      %s279 = ssub.s32 %s33, %s42
      %p280 = scmp.eq.s32.totalorder %s279, 0
      %s282 = sadd.s32 %s281, 1
      %s283 = scalar_select %p280, %s281, %s282
      %p286 = pneg %p280
      %p287 = scmp.eq.s32.totalorder %s24, 7
      %p288 = por %p286, %p287
      %p289 = scmp.ne.s32.totalorder %s281, %s284
      %p290 = scmp.eq.s32.totalorder %s24, 0
      %p291 = por %p289, %p290
      %p292 = scmp.ne.s32.totalorder %s281, %s284
      %p293 = scmp.eq.s32.totalorder %s29, 7
      %p294 = por %p292, %p293
      %p295 = scmp.ne.s32.totalorder %s284, %s285
      %p296 = scmp.eq.s32.totalorder %s29, 0
      %p297 = por %p295, %p296
      %p298 = scmp.ne.s32.totalorder %s284, %s285
      %p299 = scmp.eq.s32.totalorder %s30, 7
      %p300 = por %p298, %p299
      %p302 = scmp.ne.s32.totalorder %s285, %s301
      %p303 = scmp.eq.s32.totalorder %s30, 0
      %p304 = por %p302, %p303
      %s305 = ssub.s32 %s31, %s50
      %s306 = ssub.s32 %s32, %s46
      %s307 = sor.u32 %s305, %s306
      %p308 = scmp.eq.s32.totalorder %s307, 0
      %s310 = sadd.s32 %s309, 1
      %s311 = scalar_select %p308, %s309, %s310
      %p314 = pneg %p308
      %p315 = scmp.eq.s32.totalorder %s24, 7
      %p316 = por %p314, %p315
      %p317 = scmp.ne.s32.totalorder %s309, %s312
      %p318 = scmp.eq.s32.totalorder %s24, 0
      %p319 = por %p317, %p318
      %p320 = scmp.ne.s32.totalorder %s309, %s312
      %p321 = scmp.eq.s32.totalorder %s29, 7
      %p322 = por %p320, %p321
      %p323 = scmp.ne.s32.totalorder %s312, %s313
      %p324 = scmp.eq.s32.totalorder %s29, 0
      %p325 = por %p323, %p324
      %p326 = scmp.ne.s32.totalorder %s312, %s313
      %p327 = scmp.eq.s32.totalorder %s30, 7
      %p328 = por %p326, %p327
      %p330 = scmp.ne.s32.totalorder %s313, %s329
      %p331 = scmp.eq.s32.totalorder %s30, 0
      %p332 = por %p330, %p331
      %s333 = ssub.s32 %s31, %s50
      %s334 = ssub.s32 %s33, %s42
      %s335 = sor.u32 %s333, %s334
      %s336 = ssub.s32 %s32, %s46
      %s337 = sor.u32 %s335, %s336
      %p338 = scmp.eq.s32.totalorder %s337, 0
      %s340 = sadd.s32 %s339, 1
      %s341 = scalar_select %p338, %s339, %s340
      %p344 = pneg %p338
      %p345 = scmp.eq.s32.totalorder %s24, 7
      %p346 = por %p344, %p345
      %p347 = scmp.ne.s32.totalorder %s339, %s342
      %p348 = scmp.eq.s32.totalorder %s24, 0
      %p349 = por %p347, %p348
      %p350 = scmp.ne.s32.totalorder %s339, %s342
      %p351 = scmp.eq.s32.totalorder %s29, 7
      %p352 = por %p350, %p351
      %p353 = scmp.ne.s32.totalorder %s342, %s343
      %p354 = scmp.eq.s32.totalorder %s29, 0
      %p355 = por %p353, %p354
      %p356 = scmp.ne.s32.totalorder %s342, %s343
      %p357 = scmp.eq.s32.totalorder %s30, 7
      %p358 = por %p356, %p357
      %p360 = scmp.ne.s32.totalorder %s343, %s359
      %p361 = scmp.eq.s32.totalorder %s30, 0
      %p362 = por %p360, %p361
      %p363 = scmp.le.s32.totalorder 1, %s24
      %p364 = scmp.lt.s32.totalorder %s24, 9
      %p365 = pnand %p363, %p364
      %p366 = pneg %p365
      // Predicated region
      $region9: #{biaffine_forward.3} parent=5 // pred_check
        _
      $region10: #{biaffine_forward.3} parent=5 // pred_check_branch
        %368 = sbr.rel (%p365) target = $region12
      $region11: #{biaffine_forward.3} parent=5 // pred_region
        %s369 = ssub.s32 %s24, 1
        // Predicated region
        $region13: #{biaffine_forward.3} parent=11 // pred_check
          %p370 = pneg %p172
        $region14: #{biaffine_forward.3} parent=11 // pred_check_branch
          %372 = sbr.rel (%p370) target = $region16
        $region15: #{biaffine_forward.3} parent=11 // pred_region
          _
        $region16: #{biaffine_forward.3} parent=11 // pred_fallthru
          _
        // Predicated region
        $region17: #{biaffine_forward.3} parent=11 // pred_check
          %p373 = pneg %p193
        $region18: #{biaffine_forward.3} parent=11 // pred_check_branch
          %375 = sbr.rel (%p373) target = $region20
        $region19: #{biaffine_forward.3} parent=11 // pred_region
          _
        $region20: #{biaffine_forward.3} parent=11 // pred_fallthru
          _
      $region12: #{biaffine_forward.3} parent=5 // pred_fallthru
        _
      %p376 = scmp.lt.s32.totalorder %s24, 8
      // Predicated region
      $region21: #{biaffine_forward.3} parent=5 // pred_check
        %p377 = pneg %p376
      $region22: #{biaffine_forward.3} parent=5 // pred_check_branch
        %379 = sbr.rel (%p377) target = $region24
      $region23: #{biaffine_forward.3} parent=5 // pred_region
        // Predicated region
        $region25: #{biaffine_forward.3} parent=23 // pred_check
          %p380 = pneg %p63
        $region26: #{biaffine_forward.3} parent=23 // pred_check_branch
          %382 = sbr.rel (%p380) target = $region28
        $region27: #{biaffine_forward.3} parent=23 // pred_region
          %p383 = scmp.lt.s32.totalorder %s31, 1
          %s384 = scalar_select %p383, %s31, 1
          %s385 = smul.addr %s384, 16
          %s386 = smul.addr %s385, 4
          %s387 = scalar_lea.vmem %s0, %s386
        $region28: #{biaffine_forward.3} parent=23 // pred_fallthru
          _
        // Predicated region
        $region29: #{biaffine_forward.3} parent=23 // pred_check
          %p388 = pneg %p91
        $region30: #{biaffine_forward.3} parent=23 // pred_check_branch
          %390 = sbr.rel (%p388) target = $region32
        $region31: #{biaffine_forward.3} parent=23 // pred_region
          %p391 = scmp.lt.s32.totalorder %s31, 1
          %s392 = scalar_select %p391, %s31, 1
          %p393 = scmp.lt.s32.totalorder %s32, 1
          %s394 = scalar_select %p393, %s32, 1
          %s395 = smul.addr %s392, 2
          %s396 = sadd.s32 %s394, %s395
          %s397 = smul.addr %s396, 4
          %s398 = scalar_lea.vmem %s1, %s397
        $region32: #{biaffine_forward.3} parent=23 // pred_fallthru
          _
        // Predicated region
        $region33: #{biaffine_forward.3} parent=23 // pred_check
          %p399 = pneg %p117
        $region34: #{biaffine_forward.3} parent=23 // pred_check_branch
          %401 = sbr.rel (%p399) target = $region36
        $region35: #{biaffine_forward.3} parent=23 // pred_region
          %p402 = scmp.lt.s32.totalorder %s31, 1
          %s403 = scalar_select %p402, %s31, 1
          %s404 = smul.addr %s403, 16
          %s405 = smul.addr %s404, 4
          %s406 = scalar_lea.vmem %s2, %s405
        $region36: #{biaffine_forward.3} parent=23 // pred_fallthru
          _
        // Predicated region
        $region37: #{biaffine_forward.3} parent=23 // pred_check
          %p407 = pneg %p145
        $region38: #{biaffine_forward.3} parent=23 // pred_check_branch
          %409 = sbr.rel (%p407) target = $region40
        $region39: #{biaffine_forward.3} parent=23 // pred_region
          %p410 = scmp.lt.s32.totalorder %s31, 1
          %s411 = scalar_select %p410, %s31, 1
          %p412 = scmp.lt.s32.totalorder %s32, 1
          %s413 = scalar_select %p412, %s32, 1
          %s414 = smul.addr %s411, 2
          %s415 = sadd.s32 %s413, %s414
          %s416 = smul.addr %s415, 4
          %s417 = scalar_lea.vmem %s3, %s416
        $region40: #{biaffine_forward.3} parent=23 // pred_fallthru
          _
        // Predicated region
        $region41: #{biaffine_forward.3} parent=23 // pred_check
          %p418 = pneg %p213
        $region42: #{biaffine_forward.3} parent=23 // pred_check_branch
          %420 = sbr.rel (%p418) target = $region44
        $region43: #{biaffine_forward.3} parent=23 // pred_region
          %s421 = sand.u32 %s203, 1
          %s422 = scalar_lea.sflag [#allocation3], %s421
          %s423 = sand.u32 %s203, 1
          %s424 = smul.addr %s423, 256
          %s425 = scalar_lea.vmem [#allocation2], %s424
          %s426 = smul.u32 4, %s33
          %428 = vsyncadd %s422, 0
          %s429 = smul.addr %s426, 4
          %s430 = scalar_lea.hbm %s6, %s429
          %s431 = sshll.u32 %s430, 4
          %s432 = int_to_ptr.hbm [resolvable:$true] %s431
          %s433 = sshll.u32 %s425, 4
          %s434 = int_to_ptr.vmem [resolvable:$true] %s433
          %439 = dma.hbm_to_vmem [thread:$0]  %s432, 4096, %s434, %s422, 512, 256, 16
        $region44: #{biaffine_forward.3} parent=23 // pred_fallthru
          _
        // Predicated region
        $region45: #{biaffine_forward.3} parent=23 // pred_check
          %p440 = pneg %p239
        $region46: #{biaffine_forward.3} parent=23 // pred_check_branch
          %442 = sbr.rel (%p440) target = $region48
        $region47: #{biaffine_forward.3} parent=23 // pred_region
          %s443 = smul.u32 4, %s33
          %p444 = scmp.lt.s32.totalorder %s443, 7
          %s445 = scalar_select %p444, %s443, 7
          %s446 = scalar_lea.vmem %s7, %s445
          %s447 = smul.u32 4, %s33
        $region48: #{biaffine_forward.3} parent=23 // pred_fallthru
          _
        // Predicated region
        $region49: #{biaffine_forward.3} parent=23 // pred_check
          %p448 = pneg %p265
        $region50: #{biaffine_forward.3} parent=23 // pred_check_branch
          %450 = sbr.rel (%p448) target = $region52
        $region51: #{biaffine_forward.3} parent=23 // pred_region
          %p451 = scmp.lt.s32.totalorder %s33, 1
          %s452 = scalar_select %p451, %s33, 1
          %s453 = smul.addr %s452, 16
          %s454 = smul.addr %s453, 4
          %s455 = scalar_lea.vmem %s8, %s454
        $region52: #{biaffine_forward.3} parent=23 // pred_fallthru
          _
        // Predicated region
        $region53: #{biaffine_forward.3} parent=23 // pred_check
          %p456 = pneg %p291
        $region54: #{biaffine_forward.3} parent=23 // pred_check_branch
          %458 = sbr.rel (%p456) target = $region56
        $region55: #{biaffine_forward.3} parent=23 // pred_region
          %p459 = scmp.lt.s32.totalorder %s33, 1
          %s460 = scalar_select %p459, %s33, 1
          %s461 = scalar_lea.vmem %s9, %s460
        $region56: #{biaffine_forward.3} parent=23 // pred_fallthru
          _
      $region24: #{biaffine_forward.3} parent=5 // pred_fallthru
        _
      %p462 = scmp.le.s32.totalorder 1, %s24
      %p463 = scmp.lt.s32.totalorder %s24, 9
      %p464 = pnand %p462, %p463
      %p465 = pneg %p464
      // Predicated region
      $region57: #{biaffine_forward.3} parent=5 // pred_check
        _
      $region58: #{biaffine_forward.3} parent=5 // pred_check_branch
        %467 = sbr.rel (%p464) target = $region60
      $region59: #{biaffine_forward.3} parent=5 // pred_region
        %s468 = ssub.s32 %s24, 1
        %s469 = sand.u32 %s206, 1
        %s470 = scalar_lea.sflag [#allocation3], %s469
        %s471 = sand.u32 %s206, 1
        %s472 = smul.addr %s471, 256
        %s473 = scalar_lea.vmem [#allocation2], %s472
        // Predicated region
        $region61: #{biaffine_forward.3} parent=59 // pred_check
          %p474 = pneg %p219
        $region62: #{biaffine_forward.3} parent=59 // pred_check_branch
          %476 = sbr.rel (%p474) target = $region64
        $region63: #{biaffine_forward.3} parent=59 // pred_region
          %478 = dma.done %s470, 4096
        $region64: #{biaffine_forward.3} parent=59 // pred_fallthru
          _
        %p479 = scmp.lt.s32.totalorder %s34, 1
        %s480 = scalar_select %p479, %s34, 1
        %s481 = smul.addr %s480, 16
        %s482 = smul.addr %s481, 4
        %s483 = scalar_lea.vmem %s0, %s482
        %p484 = pneg %p69
        %p485 = pneg %p66
        %p486 = scmp.lt.s32.totalorder %s34, 1
        %s487 = scalar_select %p486, %s34, 1
        %p488 = scmp.lt.s32.totalorder %s35, 1
        %s489 = scalar_select %p488, %s35, 1
        %s490 = smul.addr %s487, 2
        %s491 = sadd.s32 %s489, %s490
        %s492 = smul.addr %s491, 4
        %s493 = scalar_lea.vmem %s1, %s492
        %p494 = pneg %p97
        %p495 = pneg %p94
        %p496 = scmp.lt.s32.totalorder %s34, 1
        %s497 = scalar_select %p496, %s34, 1
        %s498 = smul.addr %s497, 16
        %s499 = smul.addr %s498, 4
        %s500 = scalar_lea.vmem %s2, %s499
        %p501 = pneg %p123
        %p502 = pneg %p120
        %p503 = scmp.lt.s32.totalorder %s34, 1
        %s504 = scalar_select %p503, %s34, 1
        %p505 = scmp.lt.s32.totalorder %s35, 1
        %s506 = scalar_select %p505, %s35, 1
        %s507 = smul.addr %s504, 2
        %s508 = sadd.s32 %s506, %s507
        %s509 = smul.addr %s508, 4
        %s510 = scalar_lea.vmem %s3, %s509
        %p511 = pneg %p151
        %p512 = pneg %p148
        %p513 = pneg %p172
        %p514 = pneg %p169
        %p515 = pneg %p193
        %p516 = pneg %p190
        %s517 = sand.u32 %s206, 1
        %s518 = scalar_lea.sflag [#allocation3], %s517
        %s519 = sand.u32 %s206, 1
        %s520 = smul.addr %s519, 256
        %s521 = scalar_lea.vmem [#allocation2], %s520
        %p522 = pneg %p219
        %p523 = pneg %p216
        %s524 = smul.u32 4, %s36
        %p525 = scmp.lt.s32.totalorder %s524, 7
        %s526 = scalar_select %p525, %s524, 7
        %s527 = scalar_lea.vmem %s7, %s526
        %p528 = pneg %p245
        %p529 = pneg %p242
        %p530 = scmp.lt.s32.totalorder %s36, 1
        %s531 = scalar_select %p530, %s36, 1
        %s532 = smul.addr %s531, 16
        %s533 = smul.addr %s532, 4
        %s534 = scalar_lea.vmem %s8, %s533
        %p535 = pneg %p271
        %p536 = pneg %p268
        %p537 = scmp.lt.s32.totalorder %s36, 1
        %s538 = scalar_select %p537, %s36, 1
        %s539 = scalar_lea.vmem %s9, %s538
        %p540 = pneg %p297
        %p541 = pneg %p294
        %p542 = pneg %p325
        %p543 = pneg %p322
        %s544 = sand.u32 %s312, 1
        %s545 = scalar_lea.sflag [#allocation4], %s544
        %s546 = sand.u32 %s312, 1
        %s547 = smul.addr %s546, 8
        %s548 = scalar_lea.vmem [#allocation5], %s547
        %p549 = pneg %p355
        %p550 = pneg %p352
        %s551 = sand.u32 %s342, 1
        %s552 = sand.u32 %s342, 1
        %s553 = smul.addr %s552, 32
        %s554 = scalar_lea.vmem [#allocation6], %s553
        %p555 = scmp.lt.s32.totalorder %s34, 1
        %s556 = scalar_select %p555, %s34, 1
        %s557 = smul.addr %s556, 16
        %s558 = smul.addr %s557, 4
        %s559 = scalar_lea.vmem %s0, %s558
        %p560 = scmp.lt.s32.totalorder %s34, 1
        %s561 = scalar_select %p560, %s34, 1
        %p562 = scmp.lt.s32.totalorder %s35, 1
        %s563 = scalar_select %p562, %s35, 1
        %s564 = smul.addr %s561, 2
        %s565 = sadd.s32 %s563, %s564
        %s566 = smul.addr %s565, 4
        %s567 = scalar_lea.vmem %s1, %s566
        %p568 = scmp.lt.s32.totalorder %s34, 1
        %s569 = scalar_select %p568, %s34, 1
        %s570 = smul.addr %s569, 16
        %s571 = smul.addr %s570, 4
        %s572 = scalar_lea.vmem %s2, %s571
        %p573 = scmp.lt.s32.totalorder %s34, 1
        %s574 = scalar_select %p573, %s34, 1
        %p575 = scmp.lt.s32.totalorder %s35, 1
        %s576 = scalar_select %p575, %s35, 1
        %s577 = smul.addr %s574, 2
        %s578 = sadd.s32 %s576, %s577
        %s579 = smul.addr %s578, 4
        %s580 = scalar_lea.vmem %s3, %s579
        %s581 = smul.u32 4, %s36
        %s582 = smul.u32 4, %s36
        %p583 = scmp.lt.s32.totalorder %s582, 7
        %s584 = scalar_select %p583, %s582, 7
        %s585 = scalar_lea.vmem %s7, %s584
        %s586 = smul.u32 4, %s36
        %p587 = scmp.lt.s32.totalorder %s36, 1
        %s588 = scalar_select %p587, %s36, 1
        %s589 = smul.addr %s588, 16
        %s590 = smul.addr %s589, 4
        %s591 = scalar_lea.vmem %s8, %s590
        %p592 = scmp.lt.s32.totalorder %s36, 1
        %s593 = scalar_select %p592, %s36, 1
        %s594 = scalar_lea.vmem %s9, %s593
        %s595 = smul.u32 4, %s36
        %p596 = scmp.eq.s32.totalorder %s36, 0
        // Predicated region
        $region65: #{biaffine_forward.3} parent=59 // pred_check
          %p597 = pneg %p596
        $region66: #{biaffine_forward.3} parent=59 // pred_check_branch
          %599 = sbr.rel (%p597) target = $region68
        $region67: #{biaffine_forward.3} parent=59 // pred_region
          %v600 = vld [vmem:[%s567] sm:$0xf]
          %v601 = vld [vmem:[%s4] sm:$0xf]
          %v602 = vld [vmem:[%s4 + $0x4] sm:$0xf]
          %v603 = vld [vmem:[%s4 + $0x8] sm:$0xf]
          %v604 = vld [vmem:[%s4 + $0xc] sm:$0xf]
          %v605 = vld [vmem:[%s4 + $0x10] sm:$0xf]
          %v606 = vld [vmem:[%s4 + $0x14] sm:$0xf]
          %v607 = vld [vmem:[%s4 + $0x18] sm:$0xf]
          %v608 = vld [vmem:[%s4 + $0x1c] sm:$0xf]
          %v609 = vld [vmem:[%s4 + $0x20] sm:$0xf]
          %v610 = vld [vmem:[%s4 + $0x24] sm:$0xf]
          %v611 = vld [vmem:[%s4 + $0x28] sm:$0xf]
          %v612 = vld [vmem:[%s4 + $0x2c] sm:$0xf]
          %v613 = vld [vmem:[%s4 + $0x30] sm:$0xf]
          %v614 = vld [vmem:[%s4 + $0x34] sm:$0xf]
          %v615 = vld [vmem:[%s4 + $0x38] sm:$0xf]
          %v616 = vld [vmem:[%s4 + $0x3c] sm:$0xf]
          %v617 = vld [vmem:[%s5] sm:$0x1]
          %v619 = vperm.slane %v617, 0
          %v637 = vunpack.c.l.b16 %v601
          %v638 = vunpack.c.l.b16 %v602
          %v639 = vunpack.c.l.b16 %v603
          %v640 = vunpack.c.l.b16 %v604
          %v641 = vunpack.c.l.b16 %v605
          %v642 = vunpack.c.l.b16 %v606
          %v643 = vunpack.c.l.b16 %v607
          %v644 = vunpack.c.l.b16 %v608
          %v645 = vunpack.c.l.b16 %v609
          %v646 = vunpack.c.l.b16 %v610
          %v647 = vunpack.c.l.b16 %v611
          %v648 = vunpack.c.l.b16 %v612
          %v649 = vunpack.c.l.b16 %v613
          %v650 = vunpack.c.l.b16 %v614
          %v651 = vunpack.c.l.b16 %v615
          %v652 = vunpack.c.l.b16 %v616
          %v653 = vpack.c.b16 %v638, %v637
          %v654 = vpack.c.b16 %v640, %v639
          %v655 = vpack.c.b16 %v642, %v641
          %v656 = vpack.c.b16 %v644, %v643
          %v657 = vpack.c.b16 %v646, %v645
          %v658 = vpack.c.b16 %v648, %v647
          %v659 = vpack.c.b16 %v650, %v649
          %v660 = vpack.c.b16 %v652, %v651
          %669 = vmatpush.bf16.msra.mxu0 %v660
          %670 = vmatpush.bf16.msra.mxu0 %v659
          %671 = vmatpush.bf16.msra.mxu0 %v658
          %672 = vmatpush.bf16.msra.mxu0 %v657
          %673 = vmatpush.bf16.msra.mxu0 %v656
          %674 = vmatpush.bf16.msra.mxu0 %v655
          %675 = vmatpush.bf16.msra.mxu0 %v654
          %676 = vmatpush.bf16.msra.mxu0 %v653
          %677 = vmatmul.bf16.gmra.mxu0 %v600
          %v678 = vpop.f32.mrf.mxu0
          %v679 = vadd.f32 %v619, %v678
          %v680 = vpop.f32.mrf.mxu0
          %681 = vdwg.mxu0
          %v682 = vpack.c.bf16 %v679, %v679
          %v683 = vld [vmem:[%s559] sm:$0xf]
          %v684 = vld [vmem:[%s559 + $0x4] sm:$0xf]
          %v685 = vld [vmem:[%s559 + $0x8] sm:$0xf]
          %v686 = vld [vmem:[%s559 + $0xc] sm:$0xf]
          %v687 = vld [vmem:[%s559 + $0x10] sm:$0xf]
          %v688 = vld [vmem:[%s559 + $0x14] sm:$0xf]
          %v689 = vld [vmem:[%s559 + $0x18] sm:$0xf]
          %v690 = vld [vmem:[%s559 + $0x1c] sm:$0xf]
          %v691 = vld [vmem:[%s559 + $0x20] sm:$0xf]
          %v692 = vld [vmem:[%s559 + $0x24] sm:$0xf]
          %v693 = vld [vmem:[%s559 + $0x28] sm:$0xf]
          %v694 = vld [vmem:[%s559 + $0x2c] sm:$0xf]
          %v695 = vld [vmem:[%s559 + $0x30] sm:$0xf]
          %v696 = vld [vmem:[%s559 + $0x34] sm:$0xf]
          %v697 = vld [vmem:[%s559 + $0x38] sm:$0xf]
          %v698 = vld [vmem:[%s559 + $0x3c] sm:$0xf]
          %v715 = vunpack.c.l.b16 %v683
          %v716 = vunpack.c.l.b16 %v684
          %v717 = vunpack.c.l.b16 %v685
          %v718 = vunpack.c.l.b16 %v686
          %v719 = vunpack.c.l.b16 %v687
          %v720 = vunpack.c.l.b16 %v688
          %v721 = vunpack.c.l.b16 %v689
          %v722 = vunpack.c.l.b16 %v690
          %v723 = vunpack.c.l.b16 %v691
          %v724 = vunpack.c.l.b16 %v692
          %v725 = vunpack.c.l.b16 %v693
          %v726 = vunpack.c.l.b16 %v694
          %v727 = vunpack.c.l.b16 %v695
          %v728 = vunpack.c.l.b16 %v696
          %v729 = vunpack.c.l.b16 %v697
          %v730 = vunpack.c.l.b16 %v698
          %v731 = vpack.c.b16 %v716, %v715
          %v732 = vpack.c.b16 %v718, %v717
          %v733 = vpack.c.b16 %v720, %v719
          %v734 = vpack.c.b16 %v722, %v721
          %v735 = vpack.c.b16 %v724, %v723
          %v736 = vpack.c.b16 %v726, %v725
          %v737 = vpack.c.b16 %v728, %v727
          %v738 = vpack.c.b16 %v730, %v729
          %747 = vmatpush.bf16.msra.mxu0 %v738
          %748 = vmatpush.bf16.msra.mxu0 %v737
          %749 = vmatpush.bf16.msra.mxu0 %v736
          %750 = vmatpush.bf16.msra.mxu0 %v735
          %751 = vmatpush.bf16.msra.mxu0 %v734
          %752 = vmatpush.bf16.msra.mxu0 %v733
          %753 = vmatpush.bf16.msra.mxu0 %v732
          %754 = vmatpush.bf16.msra.mxu0 %v731
          %755 = vmatmul.bf16.gmra.mxu0 %v682
          %v756 = vpop.f32.mrf.mxu0
          %v757 = vadd.f32 0.0, %v756
          %v758 = vpop.f32.mrf.mxu0
          %759 = vdwg.mxu0
          %vm760 = vcmask 130048
          %761 = vst.msk [vmem:[%s548] sm:$0xff] %vm760, %v757
        $region68: #{biaffine_forward.3} parent=59 // pred_fallthru
          _
        %v762 = vld [vmem:[%s580] sm:$0xf]
        %v763 = vld [vmem:[%s572] sm:$0xf]
        %v764 = vld [vmem:[%s572 + $0x4] sm:$0xf]
        %v765 = vld [vmem:[%s572 + $0x8] sm:$0xf]
        %v766 = vld [vmem:[%s572 + $0xc] sm:$0xf]
        %v767 = vld [vmem:[%s572 + $0x10] sm:$0xf]
        %v768 = vld [vmem:[%s572 + $0x14] sm:$0xf]
        %v769 = vld [vmem:[%s572 + $0x18] sm:$0xf]
        %v770 = vld [vmem:[%s572 + $0x1c] sm:$0xf]
        %v771 = vld [vmem:[%s572 + $0x20] sm:$0xf]
        %v772 = vld [vmem:[%s572 + $0x24] sm:$0xf]
        %v773 = vld [vmem:[%s572 + $0x28] sm:$0xf]
        %v774 = vld [vmem:[%s572 + $0x2c] sm:$0xf]
        %v775 = vld [vmem:[%s572 + $0x30] sm:$0xf]
        %v776 = vld [vmem:[%s572 + $0x34] sm:$0xf]
        %v777 = vld [vmem:[%s572 + $0x38] sm:$0xf]
        %v778 = vld [vmem:[%s572 + $0x3c] sm:$0xf]
        %v779 = vld [vmem:[%s473] sm:$0xff]
        %v780 = vld [vmem:[%s473 + $0x8] sm:$0xff]
        %v781 = vld [vmem:[%s473 + $0x10] sm:$0xff]
        %v782 = vld [vmem:[%s473 + $0x18] sm:$0xff]
        %v783 = vld [vmem:[%s473 + $0x20] sm:$0xff]
        %v784 = vld [vmem:[%s473 + $0x28] sm:$0xff]
        %v785 = vld [vmem:[%s473 + $0x30] sm:$0xff]
        %v786 = vld [vmem:[%s473 + $0x38] sm:$0xff]
        %v787 = vld [vmem:[%s473 + $0x40] sm:$0xff]
        %v788 = vld [vmem:[%s473 + $0x48] sm:$0xff]
        %v789 = vld [vmem:[%s473 + $0x50] sm:$0xff]
        %v790 = vld [vmem:[%s473 + $0x58] sm:$0xff]
        %v791 = vld [vmem:[%s473 + $0x60] sm:$0xff]
        %v792 = vld [vmem:[%s473 + $0x68] sm:$0xff]
        %v793 = vld [vmem:[%s473 + $0x70] sm:$0xff]
        %v794 = vld [vmem:[%s473 + $0x78] sm:$0xff]
        %v795 = vld [vmem:[%s473 + $0x80] sm:$0xff]
        %v796 = vld [vmem:[%s473 + $0x88] sm:$0xff]
        %v797 = vld [vmem:[%s473 + $0x90] sm:$0xff]
        %v798 = vld [vmem:[%s473 + $0x98] sm:$0xff]
        %v799 = vld [vmem:[%s473 + $0xa0] sm:$0xff]
        %v800 = vld [vmem:[%s473 + $0xa8] sm:$0xff]
        %v801 = vld [vmem:[%s473 + $0xb0] sm:$0xff]
        %v802 = vld [vmem:[%s473 + $0xb8] sm:$0xff]
        %v803 = vld [vmem:[%s473 + $0xc0] sm:$0xff]
        %v804 = vld [vmem:[%s473 + $0xc8] sm:$0xff]
        %v805 = vld [vmem:[%s473 + $0xd0] sm:$0xff]
        %v806 = vld [vmem:[%s473 + $0xd8] sm:$0xff]
        %v807 = vld [vmem:[%s473 + $0xe0] sm:$0xff]
        %v808 = vld [vmem:[%s473 + $0xe8] sm:$0xff]
        %v809 = vld [vmem:[%s473 + $0xf0] sm:$0xff]
        %v810 = vld [vmem:[%s473 + $0xf8] sm:$0xff]
        %v811 = vld [vmem:[%s585] sm:$0xf]
        %v813 = vperm.slane %v811, 0
        %v814 = vperm.slane %v811, 1
        %v815 = vperm.slane %v811, 2
        %v816 = vperm.slane %v811, 3
        %v853 = vunpack.c.l.b16 %v779
        %v854 = vunpack.c.h.b16 %v779
        %v855 = vunpack.c.l.b16 %v780
        %v856 = vunpack.c.h.b16 %v780
        %v857 = vunpack.c.l.b16 %v781
        %v858 = vunpack.c.h.b16 %v781
        %v859 = vunpack.c.l.b16 %v782
        %v860 = vunpack.c.h.b16 %v782
        %v861 = vunpack.c.l.b16 %v783
        %v862 = vunpack.c.h.b16 %v783
        %v863 = vunpack.c.l.b16 %v784
        %v864 = vunpack.c.h.b16 %v784
        %v865 = vunpack.c.l.b16 %v785
        %v866 = vunpack.c.h.b16 %v785
        %v867 = vunpack.c.l.b16 %v786
        %v868 = vunpack.c.h.b16 %v786
        %v869 = vunpack.c.l.b16 %v787
        %v870 = vunpack.c.h.b16 %v787
        %v871 = vunpack.c.l.b16 %v788
        %v872 = vunpack.c.h.b16 %v788
        %v873 = vunpack.c.l.b16 %v789
        %v874 = vunpack.c.h.b16 %v789
        %v875 = vunpack.c.l.b16 %v790
        %v876 = vunpack.c.h.b16 %v790
        %v877 = vunpack.c.l.b16 %v791
        %v878 = vunpack.c.h.b16 %v791
        %v879 = vunpack.c.l.b16 %v792
        %v880 = vunpack.c.h.b16 %v792
        %v881 = vunpack.c.l.b16 %v793
        %v882 = vunpack.c.h.b16 %v793
        %v883 = vunpack.c.l.b16 %v794
        %v884 = vunpack.c.h.b16 %v794
        %v885 = vunpack.c.l.b16 %v795
        %v886 = vunpack.c.h.b16 %v795
        %v887 = vunpack.c.l.b16 %v796
        %v888 = vunpack.c.h.b16 %v796
        %v889 = vunpack.c.l.b16 %v797
        %v890 = vunpack.c.h.b16 %v797
        %v891 = vunpack.c.l.b16 %v798
        %v892 = vunpack.c.h.b16 %v798
        %v893 = vunpack.c.l.b16 %v799
        %v894 = vunpack.c.h.b16 %v799
        %v895 = vunpack.c.l.b16 %v800
        %v896 = vunpack.c.h.b16 %v800
        %v897 = vunpack.c.l.b16 %v801
        %v898 = vunpack.c.h.b16 %v801
        %v899 = vunpack.c.l.b16 %v802
        %v900 = vunpack.c.h.b16 %v802
        %v901 = vunpack.c.l.b16 %v803
        %v902 = vunpack.c.h.b16 %v803
        %v903 = vunpack.c.l.b16 %v804
        %v904 = vunpack.c.h.b16 %v804
        %v905 = vunpack.c.l.b16 %v805
        %v906 = vunpack.c.h.b16 %v805
        %v907 = vunpack.c.l.b16 %v806
        %v908 = vunpack.c.h.b16 %v806
        %v909 = vunpack.c.l.b16 %v807
        %v910 = vunpack.c.h.b16 %v807
        %v911 = vunpack.c.l.b16 %v808
        %v912 = vunpack.c.h.b16 %v808
        %v913 = vunpack.c.l.b16 %v809
        %v914 = vunpack.c.h.b16 %v809
        %v915 = vunpack.c.l.b16 %v810
        %v916 = vunpack.c.h.b16 %v810
        %v917 = vpack.c.b16 %v857, %v853
        %v918 = vpack.c.b16 %v858, %v854
        %v919 = vpack.c.b16 %v859, %v855
        %v920 = vpack.c.b16 %v860, %v856
        %v921 = vpack.c.b16 %v865, %v861
        %v922 = vpack.c.b16 %v866, %v862
        %v923 = vpack.c.b16 %v867, %v863
        %v924 = vpack.c.b16 %v868, %v864
        %v925 = vpack.c.b16 %v873, %v869
        %v926 = vpack.c.b16 %v874, %v870
        %v927 = vpack.c.b16 %v875, %v871
        %v928 = vpack.c.b16 %v876, %v872
        %v929 = vpack.c.b16 %v881, %v877
        %v930 = vpack.c.b16 %v882, %v878
        %v931 = vpack.c.b16 %v883, %v879
        %v932 = vpack.c.b16 %v884, %v880
        %v933 = vpack.c.b16 %v889, %v885
        %v934 = vpack.c.b16 %v890, %v886
        %v935 = vpack.c.b16 %v891, %v887
        %v936 = vpack.c.b16 %v892, %v888
        %v937 = vpack.c.b16 %v897, %v893
        %v938 = vpack.c.b16 %v898, %v894
        %v939 = vpack.c.b16 %v899, %v895
        %v940 = vpack.c.b16 %v900, %v896
        %v941 = vpack.c.b16 %v905, %v901
        %v942 = vpack.c.b16 %v906, %v902
        %v943 = vpack.c.b16 %v907, %v903
        %v944 = vpack.c.b16 %v908, %v904
        %v945 = vpack.c.b16 %v913, %v909
        %v946 = vpack.c.b16 %v914, %v910
        %v947 = vpack.c.b16 %v915, %v911
        %v948 = vpack.c.b16 %v916, %v912
        %981 = vmatpush.bf16.msra.mxu0 %v945
        %982 = vmatpush.bf16.msra.mxu0 %v941
        %983 = vmatpush.bf16.msra.mxu0 %v937
        %984 = vmatpush.bf16.msra.mxu0 %v933
        %985 = vmatpush.bf16.msra.mxu0 %v929
        %986 = vmatpush.bf16.msra.mxu0 %v925
        %987 = vmatpush.bf16.msra.mxu0 %v921
        %988 = vmatpush.bf16.msra.mxu0 %v917
        %989 = vmatmul.bf16.gmra.mxu0 %v762
        %v990 = vpop.f32.mrf.mxu0
        %v991 = vadd.f32 %v813, %v990
        %v992 = vpop.f32.mrf.mxu0
        %993 = vdwg.mxu0
        %994 = vmatpush.bf16.msra.mxu0 %v946
        %995 = vmatpush.bf16.msra.mxu0 %v942
        %996 = vmatpush.bf16.msra.mxu0 %v938
        %997 = vmatpush.bf16.msra.mxu0 %v934
        %998 = vmatpush.bf16.msra.mxu0 %v930
        %999 = vmatpush.bf16.msra.mxu0 %v926
        %1000 = vmatpush.bf16.msra.mxu0 %v922
        %1001 = vmatpush.bf16.msra.mxu0 %v918
        %1002 = vmatmul.bf16.gmra.mxu0 %v762
        %v1003 = vpop.f32.mrf.mxu0
        %v1004 = vadd.f32 %v814, %v1003
        %v1005 = vpop.f32.mrf.mxu0
        %1006 = vdwg.mxu0
        %1007 = vmatpush.bf16.msra.mxu0 %v947
        %1008 = vmatpush.bf16.msra.mxu0 %v943
        %1009 = vmatpush.bf16.msra.mxu0 %v939
        %1010 = vmatpush.bf16.msra.mxu0 %v935
        %1011 = vmatpush.bf16.msra.mxu0 %v931
        %1012 = vmatpush.bf16.msra.mxu0 %v927
        %1013 = vmatpush.bf16.msra.mxu0 %v923
        %1014 = vmatpush.bf16.msra.mxu0 %v919
        %1015 = vmatmul.bf16.gmra.mxu0 %v762
        %v1016 = vpop.f32.mrf.mxu0
        %v1017 = vadd.f32 %v815, %v1016
        %v1018 = vpop.f32.mrf.mxu0
        %1019 = vdwg.mxu0
        %1020 = vmatpush.bf16.msra.mxu0 %v948
        %1021 = vmatpush.bf16.msra.mxu0 %v944
        %1022 = vmatpush.bf16.msra.mxu0 %v940
        %1023 = vmatpush.bf16.msra.mxu0 %v936
        %1024 = vmatpush.bf16.msra.mxu0 %v932
        %1025 = vmatpush.bf16.msra.mxu0 %v928
        %1026 = vmatpush.bf16.msra.mxu0 %v924
        %1027 = vmatpush.bf16.msra.mxu0 %v920
        %1028 = vmatmul.bf16.gmra.mxu0 %v762
        %v1029 = vpop.f32.mrf.mxu0
        %v1030 = vadd.f32 %v816, %v1029
        %v1031 = vpop.f32.mrf.mxu0
        %1032 = vdwg.mxu0
        %v1033 = vpack.c.bf16 %v1004, %v991
        %v1034 = vpack.c.bf16 %v1030, %v1017
        %v1035 = vld [vmem:[%s591] sm:$0xf]
        %v1036 = vld [vmem:[%s591 + $0x4] sm:$0xf]
        %v1037 = vld [vmem:[%s591 + $0x8] sm:$0xf]
        %v1038 = vld [vmem:[%s591 + $0xc] sm:$0xf]
        %v1039 = vld [vmem:[%s591 + $0x10] sm:$0xf]
        %v1040 = vld [vmem:[%s591 + $0x14] sm:$0xf]
        %v1041 = vld [vmem:[%s591 + $0x18] sm:$0xf]
        %v1042 = vld [vmem:[%s591 + $0x1c] sm:$0xf]
        %v1043 = vld [vmem:[%s591 + $0x20] sm:$0xf]
        %v1044 = vld [vmem:[%s591 + $0x24] sm:$0xf]
        %v1045 = vld [vmem:[%s591 + $0x28] sm:$0xf]
        %v1046 = vld [vmem:[%s591 + $0x2c] sm:$0xf]
        %v1047 = vld [vmem:[%s591 + $0x30] sm:$0xf]
        %v1048 = vld [vmem:[%s591 + $0x34] sm:$0xf]
        %v1049 = vld [vmem:[%s591 + $0x38] sm:$0xf]
        %v1050 = vld [vmem:[%s591 + $0x3c] sm:$0xf]
        %v1051 = vld [vmem:[%s594] sm:$0x1]
        %v1053 = vperm.slane %v1051, 0
        %v1071 = vunpack.c.l.b16 %v1035
        %v1072 = vunpack.c.l.b16 %v1036
        %v1073 = vunpack.c.l.b16 %v1037
        %v1074 = vunpack.c.l.b16 %v1038
        %v1075 = vunpack.c.l.b16 %v1039
        %v1076 = vunpack.c.l.b16 %v1040
        %v1077 = vunpack.c.l.b16 %v1041
        %v1078 = vunpack.c.l.b16 %v1042
        %v1079 = vunpack.c.l.b16 %v1043
        %v1080 = vunpack.c.l.b16 %v1044
        %v1081 = vunpack.c.l.b16 %v1045
        %v1082 = vunpack.c.l.b16 %v1046
        %v1083 = vunpack.c.l.b16 %v1047
        %v1084 = vunpack.c.l.b16 %v1048
        %v1085 = vunpack.c.l.b16 %v1049
        %v1086 = vunpack.c.l.b16 %v1050
        %v1087 = vpack.c.b16 %v1072, %v1071
        %v1088 = vpack.c.b16 %v1074, %v1073
        %v1089 = vpack.c.b16 %v1076, %v1075
        %v1090 = vpack.c.b16 %v1078, %v1077
        %v1091 = vpack.c.b16 %v1080, %v1079
        %v1092 = vpack.c.b16 %v1082, %v1081
        %v1093 = vpack.c.b16 %v1084, %v1083
        %v1094 = vpack.c.b16 %v1086, %v1085
        %1103 = vmatpush.bf16.msra.mxu0 %v1094
        %1104 = vmatpush.bf16.msra.mxu0 %v1093
        %1105 = vmatpush.bf16.msra.mxu0 %v1092
        %1106 = vmatpush.bf16.msra.mxu0 %v1091
        %1107 = vmatpush.bf16.msra.mxu0 %v1090
        %1108 = vmatpush.bf16.msra.mxu0 %v1089
        %1109 = vmatpush.bf16.msra.mxu0 %v1088
        %1110 = vmatpush.bf16.msra.mxu0 %v1087
        %1111 = vmatmul.bf16.gmra.mxu0 %v762
        %v1112 = vpop.f32.mrf.mxu0
        %v1113 = vadd.f32 %v1053, %v1112
        %v1114 = vpop.f32.mrf.mxu0
        %1115 = vdwg.mxu0
        %1117 = vset.pattern.permute.xlu0 0
        %1118 = vperm.xlu0 %1117, %v1113
        %v1119 = vpop.permute.xlu0 %1118
        %v1137 = vunpack.c.l.b16 %v763
        %v1138 = vunpack.c.l.b16 %v764
        %v1139 = vunpack.c.l.b16 %v765
        %v1140 = vunpack.c.l.b16 %v766
        %v1141 = vunpack.c.l.b16 %v767
        %v1142 = vunpack.c.l.b16 %v768
        %v1143 = vunpack.c.l.b16 %v769
        %v1144 = vunpack.c.l.b16 %v770
        %v1145 = vunpack.c.l.b16 %v771
        %v1146 = vunpack.c.l.b16 %v772
        %v1147 = vunpack.c.l.b16 %v773
        %v1148 = vunpack.c.l.b16 %v774
        %v1149 = vunpack.c.l.b16 %v775
        %v1150 = vunpack.c.l.b16 %v776
        %v1151 = vunpack.c.l.b16 %v777
        %v1152 = vunpack.c.l.b16 %v778
        %v1153 = vpack.c.b16 %v1138, %v1137
        %v1154 = vpack.c.b16 %v1140, %v1139
        %v1155 = vpack.c.b16 %v1142, %v1141
        %v1156 = vpack.c.b16 %v1144, %v1143
        %v1157 = vpack.c.b16 %v1146, %v1145
        %v1158 = vpack.c.b16 %v1148, %v1147
        %v1159 = vpack.c.b16 %v1150, %v1149
        %v1160 = vpack.c.b16 %v1152, %v1151
        %1169 = vmatpush.bf16.msra.mxu0 %v1160
        %1170 = vmatpush.bf16.msra.mxu0 %v1159
        %1171 = vmatpush.bf16.msra.mxu0 %v1158
        %1172 = vmatpush.bf16.msra.mxu0 %v1157
        %1173 = vmatpush.bf16.msra.mxu0 %v1156
        %1174 = vmatpush.bf16.msra.mxu0 %v1155
        %1175 = vmatpush.bf16.msra.mxu0 %v1154
        %1176 = vmatpush.bf16.msra.mxu0 %v1153
        %1177 = vmatmul.bf16.gmra.mxu0 %v1033
        %v1178 = vpop.f32.mrf.mxu0
        %v1179 = vadd.f32 %v1119, %v1178
        %v1180 = vpop.f32.mrf.mxu0
        %1181 = vdwg.mxu0
        %vm1182 = vcmask 130048
        %1183 = vst.msk [vmem:[%s554] sm:$0xff] %vm1182, %v1179
        %1184 = vset.pattern.permute.xlu0 1
        %1185 = vperm.xlu0 %1184, %v1113
        %v1186 = vpop.permute.xlu0 %1185
        %v1189 = vunpack.c.h.b16 %v1033
        %v1190 = vpack.c.b16 %v1189, %v1189
        %1192 = vmatpush.bf16.msra.mxu0 %v1160
        %1193 = vmatpush.bf16.msra.mxu0 %v1159
        %1194 = vmatpush.bf16.msra.mxu0 %v1158
        %1195 = vmatpush.bf16.msra.mxu0 %v1157
        %1196 = vmatpush.bf16.msra.mxu0 %v1156
        %1197 = vmatpush.bf16.msra.mxu0 %v1155
        %1198 = vmatpush.bf16.msra.mxu0 %v1154
        %1199 = vmatpush.bf16.msra.mxu0 %v1153
        %1200 = vmatmul.bf16.gmra.mxu0 %v1190
        %v1201 = vpop.f32.mrf.mxu0
        %v1202 = vadd.f32 %v1186, %v1201
        %v1203 = vpop.f32.mrf.mxu0
        %1204 = vdwg.mxu0
        %s1205 = scalar_lea.vmem %s554, 8 [#allocation6]
        %1206 = vst.msk [vmem:[%s1205] sm:$0xff] %vm1182, %v1202
        %1207 = vset.pattern.permute.xlu0 2
        %1208 = vperm.xlu0 %1207, %v1113
        %v1209 = vpop.permute.xlu0 %1208
        %1211 = vmatpush.bf16.msra.mxu0 %v1160
        %1212 = vmatpush.bf16.msra.mxu0 %v1159
        %1213 = vmatpush.bf16.msra.mxu0 %v1158
        %1214 = vmatpush.bf16.msra.mxu0 %v1157
        %1215 = vmatpush.bf16.msra.mxu0 %v1156
        %1216 = vmatpush.bf16.msra.mxu0 %v1155
        %1217 = vmatpush.bf16.msra.mxu0 %v1154
        %1218 = vmatpush.bf16.msra.mxu0 %v1153
        %1219 = vmatmul.bf16.gmra.mxu0 %v1034
        %v1220 = vpop.f32.mrf.mxu0
        %v1221 = vadd.f32 %v1209, %v1220
        %v1222 = vpop.f32.mrf.mxu0
        %1223 = vdwg.mxu0
        %s1224 = scalar_lea.vmem %s554, 16 [#allocation6]
        %1225 = vst.msk [vmem:[%s1224] sm:$0xff] %vm1182, %v1221
        %1226 = vset.pattern.permute.xlu0 3
        %1227 = vperm.xlu0 %1226, %v1113
        %v1228 = vpop.permute.xlu0 %1227
        %v1231 = vunpack.c.h.b16 %v1034
        %v1232 = vpack.c.b16 %v1231, %v1231
        %1234 = vmatpush.bf16.msra.mxu0 %v1160
        %1235 = vmatpush.bf16.msra.mxu0 %v1159
        %1236 = vmatpush.bf16.msra.mxu0 %v1158
        %1237 = vmatpush.bf16.msra.mxu0 %v1157
        %1238 = vmatpush.bf16.msra.mxu0 %v1156
        %1239 = vmatpush.bf16.msra.mxu0 %v1155
        %1240 = vmatpush.bf16.msra.mxu0 %v1154
        %1241 = vmatpush.bf16.msra.mxu0 %v1153
        %1242 = vmatmul.bf16.gmra.mxu0 %v1232
        %v1243 = vpop.f32.mrf.mxu0
        %v1244 = vadd.f32 %v1228, %v1243
        %v1245 = vpop.f32.mrf.mxu0
        %1246 = vdwg.mxu0
        %s1247 = scalar_lea.vmem %s554, 24 [#allocation6]
        %1248 = vst.msk [vmem:[%s1247] sm:$0xff] %vm1182, %v1244
        %s1249 = sand.u32 %s312, 1
        %s1250 = scalar_lea.sflag [#allocation4], %s1249
        %s1251 = sand.u32 %s312, 1
        %s1252 = smul.addr %s1251, 8
        %s1253 = scalar_lea.vmem [#allocation5], %s1252
        %s1254 = sand.u32 %s342, 1
        %s1255 = sand.u32 %s342, 1
        %s1256 = smul.addr %s1255, 32
        %s1257 = scalar_lea.vmem [#allocation6], %s1256
        // Predicated region
        $region69: #{biaffine_forward.3} parent=59 // pred_check
          %p1258 = pneg %p322
        $region70: #{biaffine_forward.3} parent=59 // pred_check_branch
          %1260 = sbr.rel (%p1258) target = $region72
        $region71: #{biaffine_forward.3} parent=59 // pred_region
          %1262 = vsyncadd %s1250, 0
          %s1263 = smul.addr %s34, 2
          %s1264 = sadd.s32 %s35, %s1263
          %s1265 = smul.addr %s1264, 8
          %s1266 = scalar_lea.hbm %s10, %s1265
          %s1268 = sshll.u32 %s1253, 4
          %s1269 = int_to_ptr.vmem [resolvable:$true] %s1268
          %s1270 = sshll.u32 %s1266, 4
          %s1271 = int_to_ptr.hbm [resolvable:$true] %s1270
          %1273 = dma.vmem_to_hbm [thread:$0]  %s1269, 128, %s1271, %s1250
        $region72: #{biaffine_forward.3} parent=59 // pred_fallthru
          _
        // Predicated region
        $region73: #{biaffine_forward.3} parent=59 // pred_check
          %p1274 = pneg %p352
        $region74: #{biaffine_forward.3} parent=59 // pred_check_branch
          %1276 = sbr.rel (%p1274) target = $region76
        $region75: #{biaffine_forward.3} parent=59 // pred_region
          %s1277 = smul.u32 4, %s36
          %s1278 = smul.addr %s1277, 2
          %s1279 = sadd.s32 %s35, %s1278
          %s1280 = smul.addr %s34, 16
          %s1281 = sadd.s32 %s1279, %s1280
          %s1282 = smul.addr %s1281, 8
          %s1283 = scalar_lea.vmem %s11, %s1282
          // Predicated region
          $region77: #{biaffine_forward.3} parent=75 // pred_check
            _
          $region78: #{biaffine_forward.3} parent=75 // pred_check_branch
            %1285 = sbr.rel (0) target = $region80
          $region79: #{biaffine_forward.3} parent=75 // pred_region
            // Predicated region
            $region81: #{biaffine_forward.3} parent=79 // pred_check
              _
            $region82: #{biaffine_forward.3} parent=79 // pred_check_branch
              %1287 = sbr.rel (0) target = $region84
            $region83: #{biaffine_forward.3} parent=79 // pred_region
              // Predicated region
              $region96: #{biaffine_forward.3} parent=83 // pred_check
                _
              $region97: #{biaffine_forward.3} parent=83 // pred_check_branch
                %1309 = sbr.rel (0) target = $region99
              $region98: #{biaffine_forward.3} parent=83 // pred_region
                loop: start=0, step=1, limit=1
                $region100: #{biaffine_forward.3} parent=98 // loop_pre_header
                  _
                $region101: #{biaffine_forward.3} parent=98 // loop_header
                  %s1311 = sphi 0, %s1315
                  %p1312 = scmp.ge.s32.totalorder %s1311, 1
                  %s1316 = sphi %s1257, %s1257
                  %s1317 = sphi %s1283, %s1283
                $region102: #{biaffine_forward.3} parent=98 // loop_header_branch
                  %1314 = sbr.rel (%p1312) target = $region106
                $region103: #{biaffine_forward.3} parent=98 // loop_body
                  %v1318 = vld [vmem:[%s1316] sm:$0xff]
                  %1319 = vst [vmem:[%s1317] sm:$0xff] %v1318
                  %v1320 = vld [vmem:[%s1316 + $0x8] sm:$0xff]
                  %1321 = vst [vmem:[%s1317 + $0x10] sm:$0xff] %v1320
                  %v1322 = vld [vmem:[%s1316 + $0x10] sm:$0xff]
                  %1323 = vst [vmem:[%s1317 + $0x20] sm:$0xff] %v1322
                  %v1324 = vld [vmem:[%s1316 + $0x18] sm:$0xff]
                  %1325 = vst [vmem:[%s1317 + $0x30] sm:$0xff] %v1324
                $region104: #{biaffine_forward.3} parent=98 // loop_footer
                  %s1315 = sadd.s32 1, %s1311
                $region105: #{biaffine_forward.3} parent=98 // loop_footer_branch
                  %1310 = sbr.rel target = $region101
                $region106: #{biaffine_forward.3} parent=98 // loop_exit
                  _
              $region99: #{biaffine_forward.3} parent=83 // pred_fallthru
                _
              // Predicated region
              $region107: #{biaffine_forward.3} parent=83 // pred_check
                _
              $region108: #{biaffine_forward.3} parent=83 // pred_check_branch
                %1327 = sbr.rel target = $region110
              $region109: #{biaffine_forward.3} parent=83 // pred_region
                _
              $region110: #{biaffine_forward.3} parent=83 // pred_fallthru
                _
            $region84: #{biaffine_forward.3} parent=79 // pred_fallthru
              _
            // Predicated region
            $region85: #{biaffine_forward.3} parent=79 // pred_check
              _
            $region86: #{biaffine_forward.3} parent=79 // pred_check_branch
              %1289 = sbr.rel target = $region88
            $region87: #{biaffine_forward.3} parent=79 // pred_region
              %s1291 = ssub.s32 256, 1
              loop: start=0, step=1, limit=1
              $region89: #{biaffine_forward.3} parent=87 // loop_pre_header
                _
              $region90: #{biaffine_forward.3} parent=87 // loop_header
                %s1293 = sphi 0, %s1297
                %p1294 = scmp.ge.s32.totalorder %s1293, 1
                %s1298 = sphi %s1257, %s1257
                %s1299 = sphi %s1283, %s1283
              $region91: #{biaffine_forward.3} parent=87 // loop_header_branch
                %1296 = sbr.rel (%p1294) target = $region95
              $region92: #{biaffine_forward.3} parent=87 // loop_body
                %v1300 = vld [vmem:[%s1298] sm:%s1291]
                %1301 = vst [vmem:[%s1299] sm:%s1291] %v1300
                %v1302 = vld [vmem:[%s1298 + $0x8] sm:%s1291]
                %1303 = vst [vmem:[%s1299 + $0x10] sm:%s1291] %v1302
                %v1304 = vld [vmem:[%s1298 + $0x10] sm:%s1291]
                %1305 = vst [vmem:[%s1299 + $0x20] sm:%s1291] %v1304
                %v1306 = vld [vmem:[%s1298 + $0x18] sm:%s1291]
                %1307 = vst [vmem:[%s1299 + $0x30] sm:%s1291] %v1306
              $region93: #{biaffine_forward.3} parent=87 // loop_footer
                %s1297 = sadd.s32 1, %s1293
              $region94: #{biaffine_forward.3} parent=87 // loop_footer_branch
                %1292 = sbr.rel target = $region90
              $region95: #{biaffine_forward.3} parent=87 // loop_exit
                _
            $region88: #{biaffine_forward.3} parent=79 // pred_fallthru
              _
          $region80: #{biaffine_forward.3} parent=75 // pred_fallthru
            _
          %1328 = vnop
        $region76: #{biaffine_forward.3} parent=59 // pred_fallthru
          _
      $region60: #{biaffine_forward.3} parent=5 // pred_fallthru
        _
      %p1329 = scmp.le.s32.totalorder 2, %s24
      // Predicated region
      $region111: #{biaffine_forward.3} parent=5 // pred_check
        %p1330 = pneg %p1329
      $region112: #{biaffine_forward.3} parent=5 // pred_check_branch
        %1332 = sbr.rel (%p1330) target = $region114
      $region113: #{biaffine_forward.3} parent=5 // pred_region
        %s1333 = ssub.s32 %s24, 2
        // Predicated region
        $region115: #{biaffine_forward.3} parent=113 // pred_check
          %p1334 = pneg %p328
        $region116: #{biaffine_forward.3} parent=113 // pred_check_branch
          %1336 = sbr.rel (%p1334) target = $region118
        $region117: #{biaffine_forward.3} parent=113 // pred_region
          %s1337 = sand.u32 %s313, 1
          %s1338 = scalar_lea.sflag [#allocation4], %s1337
          %s1339 = sand.u32 %s313, 1
          %s1340 = smul.addr %s1339, 8
          %s1341 = scalar_lea.vmem [#allocation5], %s1340
          %1343 = dma.done %s1338, 128
        $region118: #{biaffine_forward.3} parent=113 // pred_fallthru
          _
        // Predicated region
        $region119: #{biaffine_forward.3} parent=113 // pred_check
          %p1344 = pneg %p358
        $region120: #{biaffine_forward.3} parent=113 // pred_check_branch
          %1346 = sbr.rel (%p1344) target = $region122
        $region121: #{biaffine_forward.3} parent=113 // pred_region
          %s1347 = sand.u32 %s343, 1
          %s1348 = sand.u32 %s343, 1
          %s1349 = smul.addr %s1348, 32
          %s1350 = scalar_lea.vmem [#allocation6], %s1349
        $region122: #{biaffine_forward.3} parent=113 // pred_fallthru
          _
      $region114: #{biaffine_forward.3} parent=5 // pred_fallthru
        _
    $region6: #{biaffine_forward.3} parent=1 // loop_footer
      %s28 = sadd.s32 1, %s24
    $region7: #{biaffine_forward.3} parent=1 // loop_footer_branch
      %23 = sbr.rel target = $region3
    $region8: #{biaffine_forward.3} parent=1 // loop_exit
      _
    %1351 = vsyncpa [#allocation3], 1
    %s1352 = scalar_lea.sflag [#allocation3], 1
    %1353 = vsyncpa %s1352, 1
    %1354 = vsyncpa [#allocation4], 1
    %s1355 = scalar_lea.sflag [#allocation4], 1
    %1356 = vsyncpa %s1355, 1

</llo_original>
